<compile_context>
chip_gen: v5e
topology: v5e:2x2
jax: 0.10.0
libtpu: 0.0.40
codegen_flags: <defaults>
</compile_context>

<pallas_src>
import functools

import jax
import jax.numpy as jnp
from jax import lax
from jax.experimental import pallas as pl
from jax.experimental.pallas import tpu as pltpu


def _im2col3x3(a):
    """3x3 SAME-conv im2col.

    a: (Hc, Wc, C) activation tile (bf16)
    returns (Hc*Wc, 9*C) bf16, tap order (kh, kw, cin).
    """
    Hc, Wc, C = a.shape
    zrow = jnp.zeros((1, Wc, C), a.dtype)
    zcol = jnp.zeros((Hc + 2, 1, C), a.dtype)
    ap = jnp.concatenate([zrow, a, zrow], axis=0)          # pad rows
    ap = jnp.concatenate([zcol, ap, zcol], axis=1)         # pad cols -> (Hc+2, Wc+2, C)
    taps = [ap[kh:kh + Hc, kw:kw + Wc, :]
            for kh in range(3) for kw in range(3)]
    return jnp.concatenate(taps, axis=-1).reshape(Hc * Wc, 9 * C)


def _down_kernel(x_ref, w1_ref, b1_ref, w2_ref, b2_ref, out_ref, *, Hh, Wh, NB):
    """NB batch elements: maxpool(2) -> conv3x3+bias -> ReLU -> conv3x3+bias -> ReLU.

    (BN is already folded into the conv weights/biases by the wrapper.)
    """
    Cp = x_ref.shape[-1] // 2        # padded input channels (W-pool pair packed in lanes)
    Cm = w1_ref.shape[-1]            # padded mid channels
    Co = w2_ref.shape[-1]            # padded out channels
    P = Hh * Wh

    # --- MaxPool2d(2) + im2col per image, stacked along M ---
    im1_rows = []
    for b in range(NB):              # static unroll (NB is small, trace-time)
        x = x_ref[b]                                           # (2*Hh, Wh, 2*Cp) bf16
        # W direction: candidates live in lane blocks [0:Cp) / [Cp:2Cp).
        wmax = jnp.maximum(x[..., :Cp], x[..., Cp:])           # (2*Hh, Wh, Cp)
        # H direction: split the leading (row) axis, pairwise max.
        r = wmax.reshape(Hh, 2, Wh, Cp)
        pooled = jnp.maximum(r[:, 0], r[:, 1])                 # (Hh, Wh, Cp)
        im1_rows.append(_im2col3x3(pooled))                    # (P, 9*Cp)
    im1 = im1_rows[0] if NB == 1 else jnp.concatenate(im1_rows, axis=0)   # (NB*P, 9Cp)

    # --- conv1 (3x3, SAME, BN1 folded) + ReLU : one MXU matmul ---
    a1 = jnp.dot(im1, w1_ref[...], preferred_element_type=jnp.float32)    # (NB*P, Cm)
    h1 = jnp.maximum(a1 + b1_ref[...], 0.0).astype(jnp.bfloat16)

    # --- conv2 (3x3, SAME, BN2 folded) + ReLU ---
    im2_rows = []
    for b in range(NB):
        hb = h1[b * P:(b + 1) * P].reshape(Hh, Wh, Cm)
        im2_rows.append(_im2col3x3(hb))                        # (P, 9*Cm)
    im2 = im2_rows[0] if NB == 1 else jnp.concatenate(im2_rows, axis=0)   # (NB*P, 9Cm)
    a2 = jnp.dot(im2, w2_ref[...], preferred_element_type=jnp.float32)    # (NB*P, Co)
    h2 = jnp.maximum(a2 + b2_ref[...], 0.0)

    out_ref[...] = h2.reshape(NB, P, Co).astype(out_ref.dtype)


def _round_up_lanes(c):
    return ((c + 127) // 128) * 128


def _pick_batch_block(N, P, Cip, Cmp):
    """Largest divisor of N that fills MXU M (~256 rows) without blowing VMEM."""
    nb = min(N, max(1, -(-256 // P)))          # ceil(256 / P), capped at N
    while N % nb:
        nb -= 1
    # keep the per-block im2col tile under ~4 MiB (bf16)
    while nb > 1 and nb * P * 9 * max(Cip, Cmp) * 2 > (4 << 20):
        nb -= 1
        while N % nb:
            nb -= 1
    return max(nb, 1)


def down_forward(x_nchw, w1_oihw, b1, g1, beta1, rm1, rv1,
                 w2_oihw, b2, g2, beta2, rm2, rv2, eps=1e-5):
    """x_nchw: (N, C_in, H, W) float32.  Returns (N, C_out, H//2, W//2) float32."""
    N, C_in, H, W = x_nchw.shape
    assert H % 2 == 0 and W % 2 == 0, "MaxPool2d(2) path assumes even H, W"
    Hh, Wh = H // 2, W // 2
    P = Hh * Wh
    C_mid = w1_oihw.shape[0]
    C_out = w2_oihw.shape[0]

    # ---- fold eval-mode BatchNorm into conv weights / biases ----
    s1 = g1 / jnp.sqrt(rv1 + eps)
    w1f = w1_oihw * s1[:, None, None, None]
    b1f = s1 * (b1 - rm1) + beta1
    s2 = g2 / jnp.sqrt(rv2 + eps)
    w2f = w2_oihw * s2[:, None, None, None]
    b2f = s2 * (b2 - rm2) + beta2

    # ---- pad all channel dims to lane width (multiple of 128) ----
    Cip, Cmp, Cop = _round_up_lanes(C_in), _round_up_lanes(C_mid), _round_up_lanes(C_out)
    NB = _pick_batch_block(N, P, Cip, Cmp)

    # x: NCHW -> NHWC, pad channels, pack the two W-pool candidates into the lane axis.
    xh = jnp.transpose(x_nchw, (0, 2, 3, 1))                       # (N, H, W, C_in)
    xh = jnp.pad(xh, ((0, 0), (0, 0), (0, 0), (0, Cip - C_in)))
    xh = xh.reshape(N, H, Wh, 2 * Cip).astype(jnp.bfloat16)

    # conv1: OIHW -> (kh, kw, cin, cout), pad, flatten to (9*Cip, Cmp).
    w1m = jnp.transpose(w1f, (2, 3, 1, 0))
    w1m = jnp.pad(w1m, ((0, 0), (0, 0), (0, Cip - C_in), (0, Cmp - C_mid)))
    w1m = w1m.reshape(9 * Cip, Cmp).astype(jnp.bfloat16)
    b1m = jnp.pad(b1f, (0, Cmp - C_mid)).reshape(1, Cmp).astype(jnp.float32)

    # conv2: OIHW -> (kh, kw, cin, cout), pad, flatten to (9*Cmp, Cop).
    w2m = jnp.transpose(w2f, (2, 3, 1, 0))
    w2m = jnp.pad(w2m, ((0, 0), (0, 0), (0, Cmp - C_mid), (0, Cop - C_out)))
    w2m = w2m.reshape(9 * Cmp, Cop).astype(jnp.bfloat16)
    b2m = jnp.pad(b2f, (0, Cop - C_out)).reshape(1, Cop).astype(jnp.float32)

    kernel = functools.partial(_down_kernel, Hh=Hh, Wh=Wh, NB=NB)
    out = pl.pallas_call(
        kernel,
        out_shape=jax.ShapeDtypeStruct((N, P, Cop), jnp.float32),
        grid_spec=pltpu.PrefetchScalarGridSpec(
            num_scalar_prefetch=0,
            grid=(N // NB,),
            in_specs=[
                pl.BlockSpec((NB, H, Wh, 2 * Cip), lambda n: (n, 0, 0, 0)),  # x
                pl.BlockSpec((9 * Cip, Cmp), lambda n: (0, 0)),              # conv1 W
                pl.BlockSpec((1, Cmp), lambda n: (0, 0)),                    # conv1 bias
                pl.BlockSpec((9 * Cmp, Cop), lambda n: (0, 0)),              # conv2 W
                pl.BlockSpec((1, Cop), lambda n: (0, 0)),                    # conv2 bias
            ],
            out_specs=pl.BlockSpec((NB, P, Cop), lambda n: (n, 0, 0)),
        ),
        compiler_params=pltpu.CompilerParams(
            dimension_semantics=("parallel",)),
    )(xh, w1m, b1m, w2m, b2m)

    out = out[..., :C_out].reshape(N, Hh, Wh, C_out)
    return jnp.transpose(out, (0, 3, 1, 2))     # back to NCHW


def _reference(x, w1, b1, g1, beta1, rm1, rv1, w2, b2, g2, beta2, rm2, rv2, eps=1e-5):
    """Pure-JAX reference: exact eval-mode semantics of the PyTorch `Down` module."""
    N, C, H, W = x.shape
    p = x.reshape(N, C, H // 2, 2, W // 2, 2).max(axis=(3, 5))   # MaxPool2d(2)

    def conv_bn_relu(h, w, b, g, bt, rm, rv):
        z = lax.conv_general_dilated(h, w, (1, 1), 'SAME',
                                     dimension_numbers=('NCHW', 'OIHW', 'NCHW'))
        z = z + b[None, :, None, None]
        z = (z - rm[None, :, None, None]) / jnp.sqrt(rv + eps)[None, :, None, None] \
            * g[None, :, None, None] + bt[None, :, None, None]
        return jnp.maximum(z, 0.0)

    h = conv_bn_relu(p, w1, b1, g1, beta1, rm1, rv1)
    return conv_bn_relu(h, w2, b2, g2, beta2, rm2, rv2)


if __name__ == "__main__":
    # Down(in_channels=4, out_channels=8) -> DoubleConv mid == out == 8.
    N, C_in, C_out, H, W = 2, 4, 8, 16, 16
    C_mid = C_out
    eps = 1e-5

    key = jax.random.PRNGKey(0)
    ks = jax.random.split(key, 16)

    x = jax.random.normal(ks[0], (N, C_in, H, W), jnp.float32)

    # Conv1 (bias=True) + BatchNorm2d(C_mid) running stats.
    w1 = 0.1 * jax.random.normal(ks[1], (C_mid, C_in, 3, 3), jnp.float32)
    b1 = 0.1 * jax.random.normal(ks[2], (C_mid,), jnp.float32)
    g1 = 1.0 + 0.1 * jax.random.normal(ks[3], (C_mid,), jnp.float32)
    beta1 = 0.1 * jax.random.normal(ks[4], (C_mid,), jnp.float32)
    rm1 = 0.1 * jax.random.normal(ks[5], (C_mid,), jnp.float32)
    rv1 = 1.0 + 0.1 * jax.random.uniform(ks[6], (C_mid,), jnp.float32)

    # Conv2 (bias=True) + BatchNorm2d(C_out) running stats.
    w2 = 0.1 * jax.random.normal(ks[7], (C_out, C_mid, 3, 3), jnp.float32)
    b2 = 0.1 * jax.random.normal(ks[8], (C_out,), jnp.float32)
    g2 = 1.0 + 0.1 * jax.random.normal(ks[9], (C_out,), jnp.float32)
    beta2 = 0.1 * jax.random.normal(ks[10], (C_out,), jnp.float32)
    rm2 = 0.1 * jax.random.normal(ks[11], (C_out,), jnp.float32)
    rv2 = 1.0 + 0.1 * jax.random.uniform(ks[12], (C_out,), jnp.float32)

    out = down_forward(x, w1, b1, g1, beta1, rm1, rv1,
                       w2, b2, g2, beta2, rm2, rv2, eps=eps)
    out = jax.block_until_ready(out)

    ref = _reference(x, w1, b1, g1, beta1, rm1, rv1,
                     w2, b2, g2, beta2, rm2, rv2, eps=eps)
    ref = jax.block_until_ready(ref)

    assert out.shape == (N, C_out, H // 2, W // 2), out.shape
    max_err = float(jnp.max(jnp.abs(out - ref)))
    # bf16 matmul operands (f32 accumulation) -> ~1e-2-scale rounding vs f32 reference.
    assert jnp.allclose(out, ref, rtol=3e-2, atol=3e-2), max_err
    print("KERNEL_OK")
</pallas_src>

<mosaic_0001>
module attributes {stable_mosaic.version = 11 : i64} {
  func.func @_down_kernel(%arg0: i32, %arg1: memref<2x16x8x256xbf16, #tpu.memory_space<vmem>>, %arg2: memref<1152x128xbf16, #tpu.memory_space<vmem>>, %arg3: memref<1x128xf32, #tpu.memory_space<vmem>>, %arg4: memref<1152x128xbf16, #tpu.memory_space<vmem>>, %arg5: memref<1x128xf32, #tpu.memory_space<vmem>>, %arg6: memref<2x64x128xf32, #tpu.memory_space<vmem>>) attributes {dimension_semantics = [#tpu.dimension_semantics<parallel>], iteration_bounds = array<i64: 1>, scalar_prefetch = 0 : i64, scratch_operands = 0 : i64, tpu.core_type = #tpu.core_type<tc>, window_params = [{transform_indices = @transform_0, window_bounds = array<i64: 2, 16, 8, 256>}, {pipeline_mode = #tpu.pipeline_mode<synchronous>, transform_indices = @transform_1, window_bounds = array<i64: 1152, 128>}, {pipeline_mode = #tpu.pipeline_mode<synchronous>, transform_indices = @transform_2, window_bounds = array<i64: 1, 128>}, {pipeline_mode = #tpu.pipeline_mode<synchronous>, transform_indices = @transform_3, window_bounds = array<i64: 1152, 128>}, {pipeline_mode = #tpu.pipeline_mode<synchronous>, transform_indices = @transform_4, window_bounds = array<i64: 1, 128>}, {transform_indices = @transform_5, window_bounds = array<i64: 2, 64, 128>}]} {
    %c0 = arith.constant 0 : index
    %c0_0 = arith.constant 0 : index
    %c0_1 = arith.constant 0 : index
    %c0_2 = arith.constant 0 : index
    %0 = vector.load %arg1[%c0, %c0_0, %c0_1, %c0_2] : memref<2x16x8x256xbf16, #tpu.memory_space<vmem>>, vector<1x16x8x256xbf16>
    %1 = vector.shape_cast %0 : vector<1x16x8x256xbf16> to vector<16x8x256xbf16>
    %2 = vector.extract_strided_slice %1 {offsets = [0, 0, 0], sizes = [16, 8, 128], strides = [1, 1, 1]} : vector<16x8x256xbf16> to vector<16x8x128xbf16>
    %3 = vector.extract_strided_slice %1 {offsets = [0, 0, 128], sizes = [16, 8, 128], strides = [1, 1, 1]} : vector<16x8x256xbf16> to vector<16x8x128xbf16>
    %4 = arith.maximumf %2, %3 : vector<16x8x128xbf16>
    %5 = vector.shape_cast %4 : vector<16x8x128xbf16> to vector<8x2x8x128xbf16>
    %6 = vector.extract_strided_slice %5 {offsets = [0, 0, 0, 0], sizes = [8, 1, 8, 128], strides = [1, 1, 1, 1]} : vector<8x2x8x128xbf16> to vector<8x1x8x128xbf16>
    %7 = vector.shape_cast %6 : vector<8x1x8x128xbf16> to vector<8x8x128xbf16>
    %8 = vector.extract_strided_slice %5 {offsets = [0, 1, 0, 0], sizes = [8, 1, 8, 128], strides = [1, 1, 1, 1]} : vector<8x2x8x128xbf16> to vector<8x1x8x128xbf16>
    %9 = vector.shape_cast %8 : vector<8x1x8x128xbf16> to vector<8x8x128xbf16>
    %10 = arith.maximumf %7, %9 : vector<8x8x128xbf16>
    %cst = arith.constant 0.000000e+00 : bf16
    %11 = vector.broadcast %cst : bf16 to vector<1x8x128xbf16>
    %cst_3 = arith.constant 0.000000e+00 : bf16
    %12 = vector.broadcast %cst_3 : bf16 to vector<10x1x128xbf16>
    %13 = tpu.concatenate %11, %10, %11 in 0 : vector<1x8x128xbf16>, vector<8x8x128xbf16>, vector<1x8x128xbf16> -> vector<10x8x128xbf16>
    %14 = tpu.concatenate %12, %13, %12 in 1 : vector<10x1x128xbf16>, vector<10x8x128xbf16>, vector<10x1x128xbf16> -> vector<10x10x128xbf16>
    %15 = vector.extract_strided_slice %14 {offsets = [0, 0, 0], sizes = [8, 8, 128], strides = [1, 1, 1]} : vector<10x10x128xbf16> to vector<8x8x128xbf16>
    %16 = vector.extract_strided_slice %14 {offsets = [0, 1, 0], sizes = [8, 8, 128], strides = [1, 1, 1]} : vector<10x10x128xbf16> to vector<8x8x128xbf16>
    %17 = vector.extract_strided_slice %14 {offsets = [0, 2, 0], sizes = [8, 8, 128], strides = [1, 1, 1]} : vector<10x10x128xbf16> to vector<8x8x128xbf16>
    %18 = vector.extract_strided_slice %14 {offsets = [1, 0, 0], sizes = [8, 8, 128], strides = [1, 1, 1]} : vector<10x10x128xbf16> to vector<8x8x128xbf16>
    %19 = vector.extract_strided_slice %14 {offsets = [1, 1, 0], sizes = [8, 8, 128], strides = [1, 1, 1]} : vector<10x10x128xbf16> to vector<8x8x128xbf16>
    %20 = vector.extract_strided_slice %14 {offsets = [1, 2, 0], sizes = [8, 8, 128], strides = [1, 1, 1]} : vector<10x10x128xbf16> to vector<8x8x128xbf16>
    %21 = vector.extract_strided_slice %14 {offsets = [2, 0, 0], sizes = [8, 8, 128], strides = [1, 1, 1]} : vector<10x10x128xbf16> to vector<8x8x128xbf16>
    %22 = vector.extract_strided_slice %14 {offsets = [2, 1, 0], sizes = [8, 8, 128], strides = [1, 1, 1]} : vector<10x10x128xbf16> to vector<8x8x128xbf16>
    %23 = vector.extract_strided_slice %14 {offsets = [2, 2, 0], sizes = [8, 8, 128], strides = [1, 1, 1]} : vector<10x10x128xbf16> to vector<8x8x128xbf16>
    %24 = tpu.concatenate %15, %16, %17, %18, %19, %20, %21, %22, %23 in 2 : vector<8x8x128xbf16>, vector<8x8x128xbf16>, vector<8x8x128xbf16>, vector<8x8x128xbf16>, vector<8x8x128xbf16>, vector<8x8x128xbf16>, vector<8x8x128xbf16>, vector<8x8x128xbf16>, vector<8x8x128xbf16> -> vector<8x8x1152xbf16>
    %25 = vector.shape_cast %24 : vector<8x8x1152xbf16> to vector<64x1152xbf16>
    %c1 = arith.constant 1 : index
    %c0_4 = arith.constant 0 : index
    %c0_5 = arith.constant 0 : index
    %c0_6 = arith.constant 0 : index
    %26 = vector.load %arg1[%c1, %c0_4, %c0_5, %c0_6] : memref<2x16x8x256xbf16, #tpu.memory_space<vmem>>, vector<1x16x8x256xbf16>
    %27 = vector.shape_cast %26 : vector<1x16x8x256xbf16> to vector<16x8x256xbf16>
    %28 = vector.extract_strided_slice %27 {offsets = [0, 0, 0], sizes = [16, 8, 128], strides = [1, 1, 1]} : vector<16x8x256xbf16> to vector<16x8x128xbf16>
    %29 = vector.extract_strided_slice %27 {offsets = [0, 0, 128], sizes = [16, 8, 128], strides = [1, 1, 1]} : vector<16x8x256xbf16> to vector<16x8x128xbf16>
    %30 = arith.maximumf %28, %29 : vector<16x8x128xbf16>
    %31 = vector.shape_cast %30 : vector<16x8x128xbf16> to vector<8x2x8x128xbf16>
    %32 = vector.extract_strided_slice %31 {offsets = [0, 0, 0, 0], sizes = [8, 1, 8, 128], strides = [1, 1, 1, 1]} : vector<8x2x8x128xbf16> to vector<8x1x8x128xbf16>
    %33 = vector.shape_cast %32 : vector<8x1x8x128xbf16> to vector<8x8x128xbf16>
    %34 = vector.extract_strided_slice %31 {offsets = [0, 1, 0, 0], sizes = [8, 1, 8, 128], strides = [1, 1, 1, 1]} : vector<8x2x8x128xbf16> to vector<8x1x8x128xbf16>
    %35 = vector.shape_cast %34 : vector<8x1x8x128xbf16> to vector<8x8x128xbf16>
    %36 = arith.maximumf %33, %35 : vector<8x8x128xbf16>
    %cst_7 = arith.constant 0.000000e+00 : bf16
    %37 = vector.broadcast %cst_7 : bf16 to vector<1x8x128xbf16>
    %cst_8 = arith.constant 0.000000e+00 : bf16
    %38 = vector.broadcast %cst_8 : bf16 to vector<10x1x128xbf16>
    %39 = tpu.concatenate %37, %36, %37 in 0 : vector<1x8x128xbf16>, vector<8x8x128xbf16>, vector<1x8x128xbf16> -> vector<10x8x128xbf16>
    %40 = tpu.concatenate %38, %39, %38 in 1 : vector<10x1x128xbf16>, vector<10x8x128xbf16>, vector<10x1x128xbf16> -> vector<10x10x128xbf16>
    %41 = vector.extract_strided_slice %40 {offsets = [0, 0, 0], sizes = [8, 8, 128], strides = [1, 1, 1]} : vector<10x10x128xbf16> to vector<8x8x128xbf16>
    %42 = vector.extract_strided_slice %40 {offsets = [0, 1, 0], sizes = [8, 8, 128], strides = [1, 1, 1]} : vector<10x10x128xbf16> to vector<8x8x128xbf16>
    %43 = vector.extract_strided_slice %40 {offsets = [0, 2, 0], sizes = [8, 8, 128], strides = [1, 1, 1]} : vector<10x10x128xbf16> to vector<8x8x128xbf16>
    %44 = vector.extract_strided_slice %40 {offsets = [1, 0, 0], sizes = [8, 8, 128], strides = [1, 1, 1]} : vector<10x10x128xbf16> to vector<8x8x128xbf16>
    %45 = vector.extract_strided_slice %40 {offsets = [1, 1, 0], sizes = [8, 8, 128], strides = [1, 1, 1]} : vector<10x10x128xbf16> to vector<8x8x128xbf16>
    %46 = vector.extract_strided_slice %40 {offsets = [1, 2, 0], sizes = [8, 8, 128], strides = [1, 1, 1]} : vector<10x10x128xbf16> to vector<8x8x128xbf16>
    %47 = vector.extract_strided_slice %40 {offsets = [2, 0, 0], sizes = [8, 8, 128], strides = [1, 1, 1]} : vector<10x10x128xbf16> to vector<8x8x128xbf16>
    %48 = vector.extract_strided_slice %40 {offsets = [2, 1, 0], sizes = [8, 8, 128], strides = [1, 1, 1]} : vector<10x10x128xbf16> to vector<8x8x128xbf16>
    %49 = vector.extract_strided_slice %40 {offsets = [2, 2, 0], sizes = [8, 8, 128], strides = [1, 1, 1]} : vector<10x10x128xbf16> to vector<8x8x128xbf16>
    %50 = tpu.concatenate %41, %42, %43, %44, %45, %46, %47, %48, %49 in 2 : vector<8x8x128xbf16>, vector<8x8x128xbf16>, vector<8x8x128xbf16>, vector<8x8x128xbf16>, vector<8x8x128xbf16>, vector<8x8x128xbf16>, vector<8x8x128xbf16>, vector<8x8x128xbf16>, vector<8x8x128xbf16> -> vector<8x8x1152xbf16>
    %51 = vector.shape_cast %50 : vector<8x8x1152xbf16> to vector<64x1152xbf16>
    %52 = tpu.concatenate %25, %51 in 0 : vector<64x1152xbf16>, vector<64x1152xbf16> -> vector<128x1152xbf16>
    %c0_9 = arith.constant 0 : index
    %c0_10 = arith.constant 0 : index
    %53 = vector.load %arg2[%c0_9, %c0_10] : memref<1152x128xbf16, #tpu.memory_space<vmem>>, vector<1152x128xbf16>
    %cst_11 = arith.constant dense<0.000000e+00> : vector<128x128xf32>
    %54 = tpu.matmul %52, %53, %cst_11 {dimension_numbers = #tpu.dot_dimension_numbers<[1], [0], [0], [1], [0, 0, 1, 1], [], []>} : vector<128x1152xbf16>, vector<1152x128xbf16>, vector<128x128xf32> -> vector<128x128xf32>
    %c0_12 = arith.constant 0 : index
    %c0_13 = arith.constant 0 : index
    %55 = vector.load %arg3[%c0_12, %c0_13] : memref<1x128xf32, #tpu.memory_space<vmem>>, vector<1x128xf32>
    %56 = vector.broadcast %55 : vector<1x128xf32> to vector<128x128xf32>
    %57 = arith.addf %54, %56 : vector<128x128xf32>
    %cst_14 = arith.constant 0.000000e+00 : f32
    %58 = vector.broadcast %cst_14 : f32 to vector<128x128xf32>
    %59 = arith.maximumf %57, %58 : vector<128x128xf32>
    %60 = arith.truncf %59 : vector<128x128xf32> to vector<128x128xbf16>
    %61 = vector.extract_strided_slice %60 {offsets = [0, 0], sizes = [64, 128], strides = [1, 1]} : vector<128x128xbf16> to vector<64x128xbf16>
    %62 = vector.shape_cast %61 : vector<64x128xbf16> to vector<8x8x128xbf16>
    %cst_15 = arith.constant 0.000000e+00 : bf16
    %63 = vector.broadcast %cst_15 : bf16 to vector<1x8x128xbf16>
    %cst_16 = arith.constant 0.000000e+00 : bf16
    %64 = vector.broadcast %cst_16 : bf16 to vector<10x1x128xbf16>
    %65 = tpu.concatenate %63, %62, %63 in 0 : vector<1x8x128xbf16>, vector<8x8x128xbf16>, vector<1x8x128xbf16> -> vector<10x8x128xbf16>
    %66 = tpu.concatenate %64, %65, %64 in 1 : vector<10x1x128xbf16>, vector<10x8x128xbf16>, vector<10x1x128xbf16> -> vector<10x10x128xbf16>
    %67 = vector.extract_strided_slice %66 {offsets = [0, 0, 0], sizes = [8, 8, 128], strides = [1, 1, 1]} : vector<10x10x128xbf16> to vector<8x8x128xbf16>
    %68 = vector.extract_strided_slice %66 {offsets = [0, 1, 0], sizes = [8, 8, 128], strides = [1, 1, 1]} : vector<10x10x128xbf16> to vector<8x8x128xbf16>
    %69 = vector.extract_strided_slice %66 {offsets = [0, 2, 0], sizes = [8, 8, 128], strides = [1, 1, 1]} : vector<10x10x128xbf16> to vector<8x8x128xbf16>
    %70 = vector.extract_strided_slice %66 {offsets = [1, 0, 0], sizes = [8, 8, 128], strides = [1, 1, 1]} : vector<10x10x128xbf16> to vector<8x8x128xbf16>
    %71 = vector.extract_strided_slice %66 {offsets = [1, 1, 0], sizes = [8, 8, 128], strides = [1, 1, 1]} : vector<10x10x128xbf16> to vector<8x8x128xbf16>
    %72 = vector.extract_strided_slice %66 {offsets = [1, 2, 0], sizes = [8, 8, 128], strides = [1, 1, 1]} : vector<10x10x128xbf16> to vector<8x8x128xbf16>
    %73 = vector.extract_strided_slice %66 {offsets = [2, 0, 0], sizes = [8, 8, 128], strides = [1, 1, 1]} : vector<10x10x128xbf16> to vector<8x8x128xbf16>
    %74 = vector.extract_strided_slice %66 {offsets = [2, 1, 0], sizes = [8, 8, 128], strides = [1, 1, 1]} : vector<10x10x128xbf16> to vector<8x8x128xbf16>
    %75 = vector.extract_strided_slice %66 {offsets = [2, 2, 0], sizes = [8, 8, 128], strides = [1, 1, 1]} : vector<10x10x128xbf16> to vector<8x8x128xbf16>
    %76 = tpu.concatenate %67, %68, %69, %70, %71, %72, %73, %74, %75 in 2 : vector<8x8x128xbf16>, vector<8x8x128xbf16>, vector<8x8x128xbf16>, vector<8x8x128xbf16>, vector<8x8x128xbf16>, vector<8x8x128xbf16>, vector<8x8x128xbf16>, vector<8x8x128xbf16>, vector<8x8x128xbf16> -> vector<8x8x1152xbf16>
    %77 = vector.shape_cast %76 : vector<8x8x1152xbf16> to vector<64x1152xbf16>
    %78 = vector.extract_strided_slice %60 {offsets = [64, 0], sizes = [64, 128], strides = [1, 1]} : vector<128x128xbf16> to vector<64x128xbf16>
    %79 = vector.shape_cast %78 : vector<64x128xbf16> to vector<8x8x128xbf16>
    %cst_17 = arith.constant 0.000000e+00 : bf16
    %80 = vector.broadcast %cst_17 : bf16 to vector<1x8x128xbf16>
    %cst_18 = arith.constant 0.000000e+00 : bf16
    %81 = vector.broadcast %cst_18 : bf16 to vector<10x1x128xbf16>
    %82 = tpu.concatenate %80, %79, %80 in 0 : vector<1x8x128xbf16>, vector<8x8x128xbf16>, vector<1x8x128xbf16> -> vector<10x8x128xbf16>
    %83 = tpu.concatenate %81, %82, %81 in 1 : vector<10x1x128xbf16>, vector<10x8x128xbf16>, vector<10x1x128xbf16> -> vector<10x10x128xbf16>
    %84 = vector.extract_strided_slice %83 {offsets = [0, 0, 0], sizes = [8, 8, 128], strides = [1, 1, 1]} : vector<10x10x128xbf16> to vector<8x8x128xbf16>
    %85 = vector.extract_strided_slice %83 {offsets = [0, 1, 0], sizes = [8, 8, 128], strides = [1, 1, 1]} : vector<10x10x128xbf16> to vector<8x8x128xbf16>
    %86 = vector.extract_strided_slice %83 {offsets = [0, 2, 0], sizes = [8, 8, 128], strides = [1, 1, 1]} : vector<10x10x128xbf16> to vector<8x8x128xbf16>
    %87 = vector.extract_strided_slice %83 {offsets = [1, 0, 0], sizes = [8, 8, 128], strides = [1, 1, 1]} : vector<10x10x128xbf16> to vector<8x8x128xbf16>
    %88 = vector.extract_strided_slice %83 {offsets = [1, 1, 0], sizes = [8, 8, 128], strides = [1, 1, 1]} : vector<10x10x128xbf16> to vector<8x8x128xbf16>
    %89 = vector.extract_strided_slice %83 {offsets = [1, 2, 0], sizes = [8, 8, 128], strides = [1, 1, 1]} : vector<10x10x128xbf16> to vector<8x8x128xbf16>
    %90 = vector.extract_strided_slice %83 {offsets = [2, 0, 0], sizes = [8, 8, 128], strides = [1, 1, 1]} : vector<10x10x128xbf16> to vector<8x8x128xbf16>
    %91 = vector.extract_strided_slice %83 {offsets = [2, 1, 0], sizes = [8, 8, 128], strides = [1, 1, 1]} : vector<10x10x128xbf16> to vector<8x8x128xbf16>
    %92 = vector.extract_strided_slice %83 {offsets = [2, 2, 0], sizes = [8, 8, 128], strides = [1, 1, 1]} : vector<10x10x128xbf16> to vector<8x8x128xbf16>
    %93 = tpu.concatenate %84, %85, %86, %87, %88, %89, %90, %91, %92 in 2 : vector<8x8x128xbf16>, vector<8x8x128xbf16>, vector<8x8x128xbf16>, vector<8x8x128xbf16>, vector<8x8x128xbf16>, vector<8x8x128xbf16>, vector<8x8x128xbf16>, vector<8x8x128xbf16>, vector<8x8x128xbf16> -> vector<8x8x1152xbf16>
    %94 = vector.shape_cast %93 : vector<8x8x1152xbf16> to vector<64x1152xbf16>
    %95 = tpu.concatenate %77, %94 in 0 : vector<64x1152xbf16>, vector<64x1152xbf16> -> vector<128x1152xbf16>
    %c0_19 = arith.constant 0 : index
    %c0_20 = arith.constant 0 : index
    %96 = vector.load %arg4[%c0_19, %c0_20] : memref<1152x128xbf16, #tpu.memory_space<vmem>>, vector<1152x128xbf16>
    %cst_21 = arith.constant dense<0.000000e+00> : vector<128x128xf32>
    %97 = tpu.matmul %95, %96, %cst_21 {dimension_numbers = #tpu.dot_dimension_numbers<[1], [0], [0], [1], [0, 0, 1, 1], [], []>} : vector<128x1152xbf16>, vector<1152x128xbf16>, vector<128x128xf32> -> vector<128x128xf32>
    %c0_22 = arith.constant 0 : index
    %c0_23 = arith.constant 0 : index
    %98 = vector.load %arg5[%c0_22, %c0_23] : memref<1x128xf32, #tpu.memory_space<vmem>>, vector<1x128xf32>
    %99 = vector.broadcast %98 : vector<1x128xf32> to vector<128x128xf32>
    %100 = arith.addf %97, %99 : vector<128x128xf32>
    %cst_24 = arith.constant 0.000000e+00 : f32
    %101 = vector.broadcast %cst_24 : f32 to vector<128x128xf32>
    %102 = arith.maximumf %100, %101 : vector<128x128xf32>
    %103 = vector.shape_cast %102 : vector<128x128xf32> to vector<2x64x128xf32>
    %c0_25 = arith.constant 0 : index
    %c0_26 = arith.constant 0 : index
    %c0_27 = arith.constant 0 : index
    %104 = vector.load %arg6[%c0_25, %c0_26, %c0_27] : memref<2x64x128xf32, #tpu.memory_space<vmem>>, vector<2x64x128xf32>
    tpu.vector_store %arg6[%c0_25, %c0_26, %c0_27], %103 {strides = array<i32>} : memref<2x64x128xf32, #tpu.memory_space<vmem>>, vector<2x64x128xf32>,
    return
  }
  func.func @transform_0(%arg0: i32) -> (i32, i32, i32, i32) {
    %c0_i32 = arith.constant 0 : i32
    %c0_i32_0 = arith.constant 0 : i32
    %c0_i32_1 = arith.constant 0 : i32
    %c0_i32_2 = arith.constant 0 : i32
    return %arg0, %c0_i32, %c0_i32_0, %c0_i32_1 : i32, i32, i32, i32
  }
  func.func @transform_1(%arg0: i32) -> (i32, i32) {
    %c0_i32 = arith.constant 0 : i32
    %c0_i32_0 = arith.constant 0 : i32
    %c0_i32_1 = arith.constant 0 : i32
    return %c0_i32, %c0_i32_0 : i32, i32
  }
  func.func @transform_2(%arg0: i32) -> (i32, i32) {
    %c0_i32 = arith.constant 0 : i32
    %c0_i32_0 = arith.constant 0 : i32
    %c0_i32_1 = arith.constant 0 : i32
    return %c0_i32, %c0_i32_0 : i32, i32
  }
  func.func @transform_3(%arg0: i32) -> (i32, i32) {
    %c0_i32 = arith.constant 0 : i32
    %c0_i32_0 = arith.constant 0 : i32
    %c0_i32_1 = arith.constant 0 : i32
    return %c0_i32, %c0_i32_0 : i32, i32
  }
  func.func @transform_4(%arg0: i32) -> (i32, i32) {
    %c0_i32 = arith.constant 0 : i32
    %c0_i32_0 = arith.constant 0 : i32
    %c0_i32_1 = arith.constant 0 : i32
    return %c0_i32, %c0_i32_0 : i32, i32
  }
  func.func @transform_5(%arg0: i32) -> (i32, i32, i32) {
    %c0_i32 = arith.constant 0 : i32
    %c0_i32_0 = arith.constant 0 : i32
    %c0_i32_1 = arith.constant 0 : i32
    return %arg0, %c0_i32, %c0_i32_0 : i32, i32, i32
  }
}

</mosaic_0001>

<llo_original>
// kernel: tpu_custom_call.1
$region0: #{tpu_custom_call.1}
  #allocation0 [shape = 'u32[]', space=smem, size = 0x4, offset = 0x4, fixed_abs, tag = 'smem constant byte address 0x4 - core index']
  #allocation1 [shape = 'u32[72,128]{1,0:T(1,128)}', space=vmem, size = 0x9000, scoped, tag = 'internal scratch']
  %s0 = inlined_call_operand.hbm [shape: bf16[2,16,8,256], index: 0, kind: input, shape index: {}]
  %s1 = inlined_call_operand.hbm [shape: bf16[1152,128], index: 1, kind: input, shape index: {}]
  %s2 = inlined_call_operand.vmem [shape: f32[1,128], index: 2, kind: input, shape index: {}]
  %s3 = inlined_call_operand.hbm [shape: bf16[1152,128], index: 3, kind: input, shape index: {}]
  %s4 = inlined_call_operand.vmem [shape: f32[1,128], index: 4, kind: input, shape index: {}]
  %s5 = inlined_call_operand.hbm [shape: f32[2,64,128], index: 5, kind: output, shape index: {}]
  %s6 = sld [smem:[#allocation0]]
  $region42: #{tpu_custom_call.1} parent=0
    _
  %s8 = ssub.s32 1, %s6
  %s9 = scalar_select 0, %s8, %s6
  $region1: #{tpu_custom_call.1} parent=0
    #allocation2 [shape = 'u8[131072]{0}', space=vmem, size = 0x20000, scoped, tag = 'input window, operand 0, single buffered']
    #allocation3 [shape = 's32[1]{0}', space=sflag, size = 0x4, scoped, tag = 'scoped memory for tpu_custom_call.1']
    #allocation4 [shape = 's32[1]{0}', space=sflag, size = 0x4, scoped, tag = 'scoped memory for tpu_custom_call.1']
    #allocation5 [shape = 'u8[294912]{0}', space=vmem, size = 0x48000, scoped, tag = 'input window, operand 1, single buffered']
    #allocation6 [shape = 's32[1]{0}', space=sflag, size = 0x4, scoped, tag = 'scoped memory for tpu_custom_call.1']
    #allocation7 [shape = 'u8[294912]{0}', space=vmem, size = 0x48000, scoped, tag = 'input window, operand 3, single buffered']
    #allocation8 [shape = 'u8[65536]{0}', space=vmem, size = 0x10000, scoped, tag = 'output window, operand 0, single buffered']
    %10 = vsyncpa [#allocation3], 0
    %11 = vsyncpa [#allocation6], 0
    %12 = vsyncpa [#allocation4], 0
    // Predicated region
    $region2: #{tpu_custom_call.1} parent=1 // pred_check
      _
    $region3: #{tpu_custom_call.1} parent=1 // pred_check_branch
      %14 = sbr.rel (0) target = $region5
    $region4: #{tpu_custom_call.1} parent=1 // pred_region
      %16 = vsyncadd [#allocation3], 0
      %s17 = sshll.u32 %s0, 4
      %s18 = int_to_ptr.hbm [resolvable:$true] %s17
      %s19 = sshll.u32 [#allocation2], 4
      %s20 = int_to_ptr.vmem [resolvable:$true] %s19
      %25 = dma.hbm_to_vmem [thread:$0]  %s18, 4096, %s20, [#allocation3], 128, 128, 8
    $region5: #{tpu_custom_call.1} parent=1 // pred_fallthru
      _
    // Predicated region
    $region6: #{tpu_custom_call.1} parent=1 // pred_check
      _
    $region7: #{tpu_custom_call.1} parent=1 // pred_check_branch
      %27 = sbr.rel (0) target = $region9
    $region8: #{tpu_custom_call.1} parent=1 // pred_region
      %29 = vsyncadd [#allocation6], 0
      %s30 = sshll.u32 %s1, 4
      %s31 = int_to_ptr.hbm [resolvable:$true] %s30
      %s32 = sshll.u32 [#allocation5], 4
      %s33 = int_to_ptr.vmem [resolvable:$true] %s32
      %38 = dma.hbm_to_vmem [thread:$0]  %s31, 9216, %s33, [#allocation6], 64, 64, 4
    $region9: #{tpu_custom_call.1} parent=1 // pred_fallthru
      _
    // Predicated region
    $region10: #{tpu_custom_call.1} parent=1 // pred_check
      _
    $region11: #{tpu_custom_call.1} parent=1 // pred_check_branch
      %40 = sbr.rel (0) target = $region13
    $region12: #{tpu_custom_call.1} parent=1 // pred_region
      _
    $region13: #{tpu_custom_call.1} parent=1 // pred_fallthru
      _
    // Predicated region
    $region14: #{tpu_custom_call.1} parent=1 // pred_check
      _
    $region15: #{tpu_custom_call.1} parent=1 // pred_check_branch
      %42 = sbr.rel (0) target = $region17
    $region16: #{tpu_custom_call.1} parent=1 // pred_region
      %44 = vsyncadd [#allocation6], 0
      %s45 = sshll.u32 %s3, 4
      %s46 = int_to_ptr.hbm [resolvable:$true] %s45
      %s47 = sshll.u32 [#allocation7], 4
      %s48 = int_to_ptr.vmem [resolvable:$true] %s47
      %53 = dma.hbm_to_vmem [thread:$0]  %s46, 9216, %s48, [#allocation6], 64, 64, 4
    $region17: #{tpu_custom_call.1} parent=1 // pred_fallthru
      _
    // Predicated region
    $region18: #{tpu_custom_call.1} parent=1 // pred_check
      _
    $region19: #{tpu_custom_call.1} parent=1 // pred_check_branch
      %55 = sbr.rel (0) target = $region21
    $region20: #{tpu_custom_call.1} parent=1 // pred_region
      _
    $region21: #{tpu_custom_call.1} parent=1 // pred_fallthru
      _
    // Predicated region
    $region22: #{tpu_custom_call.1} parent=1 // pred_check
      _
    $region23: #{tpu_custom_call.1} parent=1 // pred_check_branch
      %57 = sbr.rel (0) target = $region25
    $region24: #{tpu_custom_call.1} parent=1 // pred_region
      %59 = dma.done [#allocation3], 4096
    $region25: #{tpu_custom_call.1} parent=1 // pred_fallthru
      _
    // Predicated region
    $region26: #{tpu_custom_call.1} parent=1 // pred_check
      _
    $region27: #{tpu_custom_call.1} parent=1 // pred_check_branch
      %61 = sbr.rel (0) target = $region29
    $region28: #{tpu_custom_call.1} parent=1 // pred_region
      %63 = dma.done [#allocation6], 9216
    $region29: #{tpu_custom_call.1} parent=1 // pred_fallthru
      _
    // Predicated region
    $region30: #{tpu_custom_call.1} parent=1 // pred_check
      _
    $region31: #{tpu_custom_call.1} parent=1 // pred_check_branch
      %65 = sbr.rel (0) target = $region33
    $region32: #{tpu_custom_call.1} parent=1 // pred_region
      %67 = dma.done [#allocation6], 9216
    $region33: #{tpu_custom_call.1} parent=1 // pred_fallthru
      _
    %v69 = vld [vmem:[#allocation2] sm:$0xff]
    %v70 = vld [vmem:[#allocation2 + $0x8] sm:$0xff]
    %v71 = vld [vmem:[#allocation2 + $0x10] sm:$0xff]
    %v72 = vld [vmem:[#allocation2 + $0x18] sm:$0xff]
    %v73 = vld [vmem:[#allocation2 + $0x20] sm:$0xff]
    %v74 = vld [vmem:[#allocation2 + $0x28] sm:$0xff]
    %v75 = vld [vmem:[#allocation2 + $0x30] sm:$0xff]
    %v76 = vld [vmem:[#allocation2 + $0x38] sm:$0xff]
    %v77 = vld [vmem:[#allocation2 + $0x40] sm:$0xff]
    %v78 = vld [vmem:[#allocation2 + $0x48] sm:$0xff]
    %v79 = vld [vmem:[#allocation2 + $0x50] sm:$0xff]
    %v80 = vld [vmem:[#allocation2 + $0x58] sm:$0xff]
    %v81 = vld [vmem:[#allocation2 + $0x60] sm:$0xff]
    %v82 = vld [vmem:[#allocation2 + $0x68] sm:$0xff]
    %v83 = vld [vmem:[#allocation2 + $0x70] sm:$0xff]
    %v84 = vld [vmem:[#allocation2 + $0x78] sm:$0xff]
    %v85 = vunpack.c.l.bf16 %v69
    %v86 = vunpack.c.l.bf16 %v70
    %v87 = vunpack.c.l.bf16 %v71
    %v88 = vunpack.c.l.bf16 %v72
    %v89 = vunpack.c.l.bf16 %v73
    %v90 = vunpack.c.l.bf16 %v74
    %v91 = vunpack.c.l.bf16 %v75
    %v92 = vunpack.c.l.bf16 %v76
    %v93 = vunpack.c.l.bf16 %v77
    %v94 = vunpack.c.l.bf16 %v78
    %v95 = vunpack.c.l.bf16 %v79
    %v96 = vunpack.c.l.bf16 %v80
    %v97 = vunpack.c.l.bf16 %v81
    %v98 = vunpack.c.l.bf16 %v82
    %v99 = vunpack.c.l.bf16 %v83
    %v100 = vunpack.c.l.bf16 %v84
    %v117 = vrot.slane %v69, 4
    %v118 = vrot.slane %v70, 4
    %v119 = vrot.slane %v71, 4
    %v120 = vrot.slane %v72, 4
    %v121 = vrot.slane %v73, 4
    %v122 = vrot.slane %v74, 4
    %v123 = vrot.slane %v75, 4
    %v124 = vrot.slane %v76, 4
    %v125 = vrot.slane %v77, 4
    %v126 = vrot.slane %v78, 4
    %v127 = vrot.slane %v79, 4
    %v128 = vrot.slane %v80, 4
    %v129 = vrot.slane %v81, 4
    %v130 = vrot.slane %v82, 4
    %v131 = vrot.slane %v83, 4
    %v132 = vrot.slane %v84, 4
    %v149 = vunpack.c.l.bf16 %v117
    %v150 = vunpack.c.l.bf16 %v118
    %v151 = vunpack.c.l.bf16 %v119
    %v152 = vunpack.c.l.bf16 %v120
    %v153 = vunpack.c.l.bf16 %v121
    %v154 = vunpack.c.l.bf16 %v122
    %v155 = vunpack.c.l.bf16 %v123
    %v156 = vunpack.c.l.bf16 %v124
    %v157 = vunpack.c.l.bf16 %v125
    %v158 = vunpack.c.l.bf16 %v126
    %v159 = vunpack.c.l.bf16 %v127
    %v160 = vunpack.c.l.bf16 %v128
    %v161 = vunpack.c.l.bf16 %v129
    %v162 = vunpack.c.l.bf16 %v130
    %v163 = vunpack.c.l.bf16 %v131
    %v164 = vunpack.c.l.bf16 %v132
    %v165 = vmax.f32 %v85, %v149
    %v166 = vmax.f32 %v86, %v150
    %v167 = vmax.f32 %v87, %v151
    %v168 = vmax.f32 %v88, %v152
    %v169 = vmax.f32 %v89, %v153
    %v170 = vmax.f32 %v90, %v154
    %v171 = vmax.f32 %v91, %v155
    %v172 = vmax.f32 %v92, %v156
    %v173 = vmax.f32 %v93, %v157
    %v174 = vmax.f32 %v94, %v158
    %v175 = vmax.f32 %v95, %v159
    %v176 = vmax.f32 %v96, %v160
    %v177 = vmax.f32 %v97, %v161
    %v178 = vmax.f32 %v98, %v162
    %v179 = vmax.f32 %v99, %v163
    %v180 = vmax.f32 %v100, %v164
    %v181 = vpack.c.bf16 %v165, %v165
    %v182 = vpack.c.bf16 %v166, %v166
    %v183 = vpack.c.bf16 %v167, %v167
    %v184 = vpack.c.bf16 %v168, %v168
    %v185 = vpack.c.bf16 %v169, %v169
    %v186 = vpack.c.bf16 %v170, %v170
    %v187 = vpack.c.bf16 %v171, %v171
    %v188 = vpack.c.bf16 %v172, %v172
    %v189 = vpack.c.bf16 %v173, %v173
    %v190 = vpack.c.bf16 %v174, %v174
    %v191 = vpack.c.bf16 %v175, %v175
    %v192 = vpack.c.bf16 %v176, %v176
    %v193 = vpack.c.bf16 %v177, %v177
    %v194 = vpack.c.bf16 %v178, %v178
    %v195 = vpack.c.bf16 %v179, %v179
    %v196 = vpack.c.bf16 %v180, %v180
    %v197 = vunpack.c.l.bf16 %v181
    %v198 = vunpack.c.l.bf16 %v183
    %v199 = vunpack.c.l.bf16 %v185
    %v200 = vunpack.c.l.bf16 %v187
    %v201 = vunpack.c.l.bf16 %v189
    %v202 = vunpack.c.l.bf16 %v191
    %v203 = vunpack.c.l.bf16 %v193
    %v204 = vunpack.c.l.bf16 %v195
    %v205 = vunpack.c.l.bf16 %v182
    %v206 = vunpack.c.l.bf16 %v184
    %v207 = vunpack.c.l.bf16 %v186
    %v208 = vunpack.c.l.bf16 %v188
    %v209 = vunpack.c.l.bf16 %v190
    %v210 = vunpack.c.l.bf16 %v192
    %v211 = vunpack.c.l.bf16 %v194
    %v212 = vunpack.c.l.bf16 %v196
    %v213 = vmax.f32 %v197, %v205
    %v214 = vmax.f32 %v198, %v206
    %v215 = vmax.f32 %v199, %v207
    %v216 = vmax.f32 %v200, %v208
    %v217 = vmax.f32 %v201, %v209
    %v218 = vmax.f32 %v202, %v210
    %v219 = vmax.f32 %v203, %v211
    %v220 = vmax.f32 %v204, %v212
    %v221 = vpack.c.bf16 %v213, %v213
    %v222 = vpack.c.bf16 %v214, %v214
    %v223 = vpack.c.bf16 %v215, %v215
    %v224 = vpack.c.bf16 %v216, %v216
    %v225 = vpack.c.bf16 %v217, %v217
    %v226 = vpack.c.bf16 %v218, %v218
    %v227 = vpack.c.bf16 %v219, %v219
    %v228 = vpack.c.bf16 %v220, %v220
    %v230 = vshrl.u32 0, 16
    %v232 = vrot.slane %v230, 7
    %v233 = vshll.u32 0, 16
    %v235 = vor.u32 %v232, %v233
    %v237 = vshrl.u32 %v221, 16
    %v239 = vrot.slane %v237, 7
    %v240 = vshll.u32 %v221, 16
    %v242 = vor.u32 %v239, %v240
    %v244 = vshrl.u32 %v222, 16
    %v246 = vrot.slane %v244, 7
    %v247 = vshll.u32 %v222, 16
    %v249 = vor.u32 %v246, %v247
    %v251 = vshrl.u32 %v223, 16
    %v253 = vrot.slane %v251, 7
    %v254 = vshll.u32 %v223, 16
    %v256 = vor.u32 %v253, %v254
    %v258 = vshrl.u32 %v224, 16
    %v260 = vrot.slane %v258, 7
    %v261 = vshll.u32 %v224, 16
    %v263 = vor.u32 %v260, %v261
    %v265 = vshrl.u32 %v225, 16
    %v267 = vrot.slane %v265, 7
    %v268 = vshll.u32 %v225, 16
    %v270 = vor.u32 %v267, %v268
    %v272 = vshrl.u32 %v226, 16
    %v274 = vrot.slane %v272, 7
    %v275 = vshll.u32 %v226, 16
    %v277 = vor.u32 %v274, %v275
    %v279 = vshrl.u32 %v227, 16
    %v281 = vrot.slane %v279, 7
    %v282 = vshll.u32 %v227, 16
    %v284 = vor.u32 %v281, %v282
    %v286 = vshrl.u32 %v228, 16
    %v288 = vrot.slane %v286, 7
    %v289 = vshll.u32 %v228, 16
    %v291 = vor.u32 %v288, %v289
    %vm301 = vcmask 1040384
    %vm302 = vsmask.f32 256
    %vm303 = vmand %vm301, %vm302
    %v304 = vsel %vm303, 0, %v235
    %v305 = vsel %vm303, 0, %v242
    %v306 = vsel %vm303, 0, %v249
    %v307 = vsel %vm303, 0, %v256
    %v308 = vsel %vm303, 0, %v263
    %v309 = vsel %vm303, 0, %v270
    %v310 = vsel %vm303, 0, %v277
    %v311 = vsel %vm303, 0, %v284
    %v312 = vsel %vm303, 0, %v291
    %vm313 = vcmask 1044480
    %vm314 = vsmask.f32 4352
    %vm315 = vmand %vm313, %vm314
    %v316 = vsel %vm315, %v304, 0
    %v317 = vsel %vm315, %v305, 0
    %v318 = vsel %vm315, %v306, 0
    %v319 = vsel %vm315, %v307, 0
    %v320 = vsel %vm315, %v308, 0
    %v321 = vsel %vm315, %v309, 0
    %v322 = vsel %vm315, %v310, 0
    %v323 = vsel %vm315, %v311, 0
    %v324 = vsel %vm315, %v312, 0
    %v326 = vshrl.u32 %v316, 16
    %v328 = vshll.u32 %v316, 16
    %v330 = vrot.slane %v328, 1
    %v331 = vor.u32 %v326, %v330
    %v333 = vshrl.u32 %v317, 16
    %v335 = vshll.u32 %v317, 16
    %v337 = vrot.slane %v335, 1
    %v338 = vor.u32 %v333, %v337
    %v340 = vshrl.u32 %v318, 16
    %v342 = vshll.u32 %v318, 16
    %v344 = vrot.slane %v342, 1
    %v345 = vor.u32 %v340, %v344
    %v347 = vshrl.u32 %v319, 16
    %v349 = vshll.u32 %v319, 16
    %v351 = vrot.slane %v349, 1
    %v352 = vor.u32 %v347, %v351
    %v354 = vshrl.u32 %v320, 16
    %v356 = vshll.u32 %v320, 16
    %v358 = vrot.slane %v356, 1
    %v359 = vor.u32 %v354, %v358
    %v361 = vshrl.u32 %v321, 16
    %v363 = vshll.u32 %v321, 16
    %v365 = vrot.slane %v363, 1
    %v366 = vor.u32 %v361, %v365
    %v368 = vshrl.u32 %v322, 16
    %v370 = vshll.u32 %v322, 16
    %v372 = vrot.slane %v370, 1
    %v373 = vor.u32 %v368, %v372
    %v375 = vshrl.u32 %v323, 16
    %v377 = vshll.u32 %v323, 16
    %v379 = vrot.slane %v377, 1
    %v380 = vor.u32 %v375, %v379
    %v389 = vrot.slane %v316, 1
    %v390 = vrot.slane %v317, 1
    %v391 = vrot.slane %v318, 1
    %v392 = vrot.slane %v319, 1
    %v393 = vrot.slane %v320, 1
    %v394 = vrot.slane %v321, 1
    %v395 = vrot.slane %v322, 1
    %v396 = vrot.slane %v323, 1
    %v398 = vshrl.u32 %v324, 16
    %v400 = vshll.u32 %v324, 16
    %v402 = vrot.slane %v400, 1
    %v403 = vor.u32 %v398, %v402
    %v405 = vrot.slane %v324, 1
    %v406 = vunpack.c.l.b16 %v316
    %v407 = vunpack.c.l.b16 %v331
    %v408 = vunpack.c.l.b16 %v389
    %v409 = vunpack.c.l.b16 %v317
    %v410 = vunpack.c.l.b16 %v338
    %v411 = vunpack.c.l.b16 %v390
    %v412 = vunpack.c.l.b16 %v318
    %v413 = vunpack.c.l.b16 %v345
    %v414 = vunpack.c.l.b16 %v391
    %v415 = vunpack.c.l.b16 %v319
    %v416 = vunpack.c.l.b16 %v352
    %v417 = vunpack.c.l.b16 %v392
    %v418 = vunpack.c.l.b16 %v320
    %v419 = vunpack.c.l.b16 %v359
    %v420 = vunpack.c.l.b16 %v393
    %v421 = vunpack.c.l.b16 %v321
    %v422 = vunpack.c.l.b16 %v366
    %v423 = vunpack.c.l.b16 %v394
    %v424 = vunpack.c.l.b16 %v322
    %v425 = vunpack.c.l.b16 %v373
    %v426 = vunpack.c.l.b16 %v395
    %v427 = vunpack.c.l.b16 %v323
    %v428 = vunpack.c.l.b16 %v380
    %v429 = vunpack.c.l.b16 %v396
    %v430 = vunpack.c.l.b16 %v324
    %v431 = vunpack.c.l.b16 %v403
    %v432 = vunpack.c.l.b16 %v405
    %s433 = scalar_lea.vmem [#allocation2], 128
    %v434 = vld [vmem:[%s433] sm:$0xff]
    %v435 = vld [vmem:[%s433 + $0x8] sm:$0xff]
    %v436 = vld [vmem:[%s433 + $0x10] sm:$0xff]
    %v437 = vld [vmem:[%s433 + $0x18] sm:$0xff]
    %v438 = vld [vmem:[%s433 + $0x20] sm:$0xff]
    %v439 = vld [vmem:[%s433 + $0x28] sm:$0xff]
    %v440 = vld [vmem:[%s433 + $0x30] sm:$0xff]
    %v441 = vld [vmem:[%s433 + $0x38] sm:$0xff]
    %v442 = vld [vmem:[%s433 + $0x40] sm:$0xff]
    %v443 = vld [vmem:[%s433 + $0x48] sm:$0xff]
    %v444 = vld [vmem:[%s433 + $0x50] sm:$0xff]
    %v445 = vld [vmem:[%s433 + $0x58] sm:$0xff]
    %v446 = vld [vmem:[%s433 + $0x60] sm:$0xff]
    %v447 = vld [vmem:[%s433 + $0x68] sm:$0xff]
    %v448 = vld [vmem:[%s433 + $0x70] sm:$0xff]
    %v449 = vld [vmem:[%s433 + $0x78] sm:$0xff]
    %v450 = vunpack.c.l.bf16 %v434
    %v451 = vunpack.c.l.bf16 %v435
    %v452 = vunpack.c.l.bf16 %v436
    %v453 = vunpack.c.l.bf16 %v437
    %v454 = vunpack.c.l.bf16 %v438
    %v455 = vunpack.c.l.bf16 %v439
    %v456 = vunpack.c.l.bf16 %v440
    %v457 = vunpack.c.l.bf16 %v441
    %v458 = vunpack.c.l.bf16 %v442
    %v459 = vunpack.c.l.bf16 %v443
    %v460 = vunpack.c.l.bf16 %v444
    %v461 = vunpack.c.l.bf16 %v445
    %v462 = vunpack.c.l.bf16 %v446
    %v463 = vunpack.c.l.bf16 %v447
    %v464 = vunpack.c.l.bf16 %v448
    %v465 = vunpack.c.l.bf16 %v449
    %v482 = vrot.slane %v434, 4
    %v483 = vrot.slane %v435, 4
    %v484 = vrot.slane %v436, 4
    %v485 = vrot.slane %v437, 4
    %v486 = vrot.slane %v438, 4
    %v487 = vrot.slane %v439, 4
    %v488 = vrot.slane %v440, 4
    %v489 = vrot.slane %v441, 4
    %v490 = vrot.slane %v442, 4
    %v491 = vrot.slane %v443, 4
    %v492 = vrot.slane %v444, 4
    %v493 = vrot.slane %v445, 4
    %v494 = vrot.slane %v446, 4
    %v495 = vrot.slane %v447, 4
    %v496 = vrot.slane %v448, 4
    %v497 = vrot.slane %v449, 4
    %v514 = vunpack.c.l.bf16 %v482
    %v515 = vunpack.c.l.bf16 %v483
    %v516 = vunpack.c.l.bf16 %v484
    %v517 = vunpack.c.l.bf16 %v485
    %v518 = vunpack.c.l.bf16 %v486
    %v519 = vunpack.c.l.bf16 %v487
    %v520 = vunpack.c.l.bf16 %v488
    %v521 = vunpack.c.l.bf16 %v489
    %v522 = vunpack.c.l.bf16 %v490
    %v523 = vunpack.c.l.bf16 %v491
    %v524 = vunpack.c.l.bf16 %v492
    %v525 = vunpack.c.l.bf16 %v493
    %v526 = vunpack.c.l.bf16 %v494
    %v527 = vunpack.c.l.bf16 %v495
    %v528 = vunpack.c.l.bf16 %v496
    %v529 = vunpack.c.l.bf16 %v497
    %v530 = vmax.f32 %v450, %v514
    %v531 = vmax.f32 %v451, %v515
    %v532 = vmax.f32 %v452, %v516
    %v533 = vmax.f32 %v453, %v517
    %v534 = vmax.f32 %v454, %v518
    %v535 = vmax.f32 %v455, %v519
    %v536 = vmax.f32 %v456, %v520
    %v537 = vmax.f32 %v457, %v521
    %v538 = vmax.f32 %v458, %v522
    %v539 = vmax.f32 %v459, %v523
    %v540 = vmax.f32 %v460, %v524
    %v541 = vmax.f32 %v461, %v525
    %v542 = vmax.f32 %v462, %v526
    %v543 = vmax.f32 %v463, %v527
    %v544 = vmax.f32 %v464, %v528
    %v545 = vmax.f32 %v465, %v529
    %v546 = vpack.c.bf16 %v530, %v530
    %v547 = vpack.c.bf16 %v531, %v531
    %v548 = vpack.c.bf16 %v532, %v532
    %v549 = vpack.c.bf16 %v533, %v533
    %v550 = vpack.c.bf16 %v534, %v534
    %v551 = vpack.c.bf16 %v535, %v535
    %v552 = vpack.c.bf16 %v536, %v536
    %v553 = vpack.c.bf16 %v537, %v537
    %v554 = vpack.c.bf16 %v538, %v538
    %v555 = vpack.c.bf16 %v539, %v539
    %v556 = vpack.c.bf16 %v540, %v540
    %v557 = vpack.c.bf16 %v541, %v541
    %v558 = vpack.c.bf16 %v542, %v542
    %v559 = vpack.c.bf16 %v543, %v543
    %v560 = vpack.c.bf16 %v544, %v544
    %v561 = vpack.c.bf16 %v545, %v545
    %v562 = vunpack.c.l.bf16 %v546
    %v563 = vunpack.c.l.bf16 %v548
    %v564 = vunpack.c.l.bf16 %v550
    %v565 = vunpack.c.l.bf16 %v552
    %v566 = vunpack.c.l.bf16 %v554
    %v567 = vunpack.c.l.bf16 %v556
    %v568 = vunpack.c.l.bf16 %v558
    %v569 = vunpack.c.l.bf16 %v560
    %v570 = vunpack.c.l.bf16 %v547
    %v571 = vunpack.c.l.bf16 %v549
    %v572 = vunpack.c.l.bf16 %v551
    %v573 = vunpack.c.l.bf16 %v553
    %v574 = vunpack.c.l.bf16 %v555
    %v575 = vunpack.c.l.bf16 %v557
    %v576 = vunpack.c.l.bf16 %v559
    %v577 = vunpack.c.l.bf16 %v561
    %v578 = vmax.f32 %v562, %v570
    %v579 = vmax.f32 %v563, %v571
    %v580 = vmax.f32 %v564, %v572
    %v581 = vmax.f32 %v565, %v573
    %v582 = vmax.f32 %v566, %v574
    %v583 = vmax.f32 %v567, %v575
    %v584 = vmax.f32 %v568, %v576
    %v585 = vmax.f32 %v569, %v577
    %v586 = vpack.c.bf16 %v578, %v578
    %v587 = vpack.c.bf16 %v579, %v579
    %v588 = vpack.c.bf16 %v580, %v580
    %v589 = vpack.c.bf16 %v581, %v581
    %v590 = vpack.c.bf16 %v582, %v582
    %v591 = vpack.c.bf16 %v583, %v583
    %v592 = vpack.c.bf16 %v584, %v584
    %v593 = vpack.c.bf16 %v585, %v585
    %v595 = vshrl.u32 %v586, 16
    %v597 = vrot.slane %v595, 7
    %v598 = vshll.u32 %v586, 16
    %v600 = vor.u32 %v597, %v598
    %v602 = vshrl.u32 %v587, 16
    %v604 = vrot.slane %v602, 7
    %v605 = vshll.u32 %v587, 16
    %v607 = vor.u32 %v604, %v605
    %v609 = vshrl.u32 %v588, 16
    %v611 = vrot.slane %v609, 7
    %v612 = vshll.u32 %v588, 16
    %v614 = vor.u32 %v611, %v612
    %v616 = vshrl.u32 %v589, 16
    %v618 = vrot.slane %v616, 7
    %v619 = vshll.u32 %v589, 16
    %v621 = vor.u32 %v618, %v619
    %v623 = vshrl.u32 %v590, 16
    %v625 = vrot.slane %v623, 7
    %v626 = vshll.u32 %v590, 16
    %v628 = vor.u32 %v625, %v626
    %v630 = vshrl.u32 %v591, 16
    %v632 = vrot.slane %v630, 7
    %v633 = vshll.u32 %v591, 16
    %v635 = vor.u32 %v632, %v633
    %v637 = vshrl.u32 %v592, 16
    %v639 = vrot.slane %v637, 7
    %v640 = vshll.u32 %v592, 16
    %v642 = vor.u32 %v639, %v640
    %v644 = vshrl.u32 %v593, 16
    %v646 = vrot.slane %v644, 7
    %v647 = vshll.u32 %v593, 16
    %v649 = vor.u32 %v646, %v647
    %v658 = vsel %vm303, 0, %v600
    %v659 = vsel %vm303, 0, %v607
    %v660 = vsel %vm303, 0, %v614
    %v661 = vsel %vm303, 0, %v621
    %v662 = vsel %vm303, 0, %v628
    %v663 = vsel %vm303, 0, %v635
    %v664 = vsel %vm303, 0, %v642
    %v665 = vsel %vm303, 0, %v649
    %v666 = vsel %vm315, %v658, 0
    %v667 = vsel %vm315, %v659, 0
    %v668 = vsel %vm315, %v660, 0
    %v669 = vsel %vm315, %v661, 0
    %v670 = vsel %vm315, %v662, 0
    %v671 = vsel %vm315, %v663, 0
    %v672 = vsel %vm315, %v664, 0
    %v673 = vsel %vm315, %v665, 0
    %v675 = vshrl.u32 %v666, 16
    %v677 = vshll.u32 %v666, 16
    %v679 = vrot.slane %v677, 1
    %v680 = vor.u32 %v675, %v679
    %v682 = vshrl.u32 %v667, 16
    %v684 = vshll.u32 %v667, 16
    %v686 = vrot.slane %v684, 1
    %v687 = vor.u32 %v682, %v686
    %v689 = vshrl.u32 %v668, 16
    %v691 = vshll.u32 %v668, 16
    %v693 = vrot.slane %v691, 1
    %v694 = vor.u32 %v689, %v693
    %v696 = vshrl.u32 %v669, 16
    %v698 = vshll.u32 %v669, 16
    %v700 = vrot.slane %v698, 1
    %v701 = vor.u32 %v696, %v700
    %v703 = vshrl.u32 %v670, 16
    %v705 = vshll.u32 %v670, 16
    %v707 = vrot.slane %v705, 1
    %v708 = vor.u32 %v703, %v707
    %v710 = vshrl.u32 %v671, 16
    %v712 = vshll.u32 %v671, 16
    %v714 = vrot.slane %v712, 1
    %v715 = vor.u32 %v710, %v714
    %v717 = vshrl.u32 %v672, 16
    %v719 = vshll.u32 %v672, 16
    %v721 = vrot.slane %v719, 1
    %v722 = vor.u32 %v717, %v721
    %v730 = vrot.slane %v666, 1
    %v731 = vrot.slane %v667, 1
    %v732 = vrot.slane %v668, 1
    %v733 = vrot.slane %v669, 1
    %v734 = vrot.slane %v670, 1
    %v735 = vrot.slane %v671, 1
    %v736 = vrot.slane %v672, 1
    %v738 = vshrl.u32 %v673, 16
    %v740 = vshll.u32 %v673, 16
    %v742 = vrot.slane %v740, 1
    %v743 = vor.u32 %v738, %v742
    %v745 = vrot.slane %v673, 1
    %v746 = vunpack.c.l.b16 %v666
    %v747 = vunpack.c.l.b16 %v680
    %v748 = vunpack.c.l.b16 %v730
    %v749 = vunpack.c.l.b16 %v667
    %v750 = vunpack.c.l.b16 %v687
    %v751 = vunpack.c.l.b16 %v731
    %v752 = vunpack.c.l.b16 %v668
    %v753 = vunpack.c.l.b16 %v694
    %v754 = vunpack.c.l.b16 %v732
    %v755 = vunpack.c.l.b16 %v669
    %v756 = vunpack.c.l.b16 %v701
    %v757 = vunpack.c.l.b16 %v733
    %v758 = vunpack.c.l.b16 %v670
    %v759 = vunpack.c.l.b16 %v708
    %v760 = vunpack.c.l.b16 %v734
    %v761 = vunpack.c.l.b16 %v671
    %v762 = vunpack.c.l.b16 %v715
    %v763 = vunpack.c.l.b16 %v735
    %v764 = vunpack.c.l.b16 %v672
    %v765 = vunpack.c.l.b16 %v722
    %v766 = vunpack.c.l.b16 %v736
    %v767 = vunpack.c.l.b16 %v673
    %v768 = vunpack.c.l.b16 %v743
    %v769 = vunpack.c.l.b16 %v745
    %v770 = vpack.c.b16 %v409, %v406
    %v771 = vpack.c.b16 %v410, %v407
    %v772 = vpack.c.b16 %v411, %v408
    %v773 = vpack.c.b16 %v412, %v409
    %v774 = vpack.c.b16 %v413, %v410
    %v775 = vpack.c.b16 %v414, %v411
    %v776 = vpack.c.b16 %v415, %v412
    %v777 = vpack.c.b16 %v416, %v413
    %v778 = vpack.c.b16 %v417, %v414
    %v779 = vpack.c.b16 %v418, %v415
    %v780 = vpack.c.b16 %v419, %v416
    %v781 = vpack.c.b16 %v420, %v417
    %v782 = vpack.c.b16 %v421, %v418
    %v783 = vpack.c.b16 %v422, %v419
    %v784 = vpack.c.b16 %v423, %v420
    %v785 = vpack.c.b16 %v424, %v421
    %v786 = vpack.c.b16 %v425, %v422
    %v787 = vpack.c.b16 %v426, %v423
    %v788 = vpack.c.b16 %v427, %v424
    %v789 = vpack.c.b16 %v428, %v425
    %v790 = vpack.c.b16 %v429, %v426
    %v791 = vpack.c.b16 %v430, %v427
    %v792 = vpack.c.b16 %v431, %v428
    %v793 = vpack.c.b16 %v432, %v429
    %v794 = vpack.c.b16 %v406, %v430
    %v795 = vpack.c.b16 %v407, %v431
    %v796 = vpack.c.b16 %v408, %v432
    %v824 = vpack.c.b16 %v746, %v406
    %v825 = vpack.c.b16 %v747, %v407
    %v826 = vpack.c.b16 %v748, %v408
    %v827 = vpack.c.b16 %v749, %v746
    %v828 = vpack.c.b16 %v750, %v747
    %v829 = vpack.c.b16 %v751, %v748
    %v830 = vpack.c.b16 %v752, %v749
    %v831 = vpack.c.b16 %v753, %v750
    %v832 = vpack.c.b16 %v754, %v751
    %v833 = vpack.c.b16 %v755, %v752
    %v834 = vpack.c.b16 %v756, %v753
    %v835 = vpack.c.b16 %v757, %v754
    %v836 = vpack.c.b16 %v758, %v755
    %v837 = vpack.c.b16 %v759, %v756
    %v838 = vpack.c.b16 %v760, %v757
    %v839 = vpack.c.b16 %v761, %v758
    %v840 = vpack.c.b16 %v762, %v759
    %v841 = vpack.c.b16 %v763, %v760
    %v842 = vpack.c.b16 %v764, %v761
    %v843 = vpack.c.b16 %v765, %v762
    %v844 = vpack.c.b16 %v766, %v763
    %v845 = vpack.c.b16 %v767, %v764
    %v846 = vpack.c.b16 %v768, %v765
    %v847 = vpack.c.b16 %v769, %v766
    %v848 = vpack.c.b16 %v406, %v767
    %v849 = vpack.c.b16 %v407, %v768
    %v850 = vpack.c.b16 %v408, %v769
    %v878 = vld [vmem:[#allocation5] sm:$0xf]
    %v879 = vld [vmem:[#allocation5 + $0x4] sm:$0xf]
    %v880 = vld [vmem:[#allocation5 + $0x8] sm:$0xf]
    %v881 = vld [vmem:[#allocation5 + $0xc] sm:$0xf]
    %v882 = vld [vmem:[#allocation5 + $0x10] sm:$0xf]
    %v883 = vld [vmem:[#allocation5 + $0x14] sm:$0xf]
    %v884 = vld [vmem:[#allocation5 + $0x18] sm:$0xf]
    %v885 = vld [vmem:[#allocation5 + $0x1c] sm:$0xf]
    %v886 = vld [vmem:[#allocation5 + $0x20] sm:$0xf]
    %v887 = vld [vmem:[#allocation5 + $0x24] sm:$0xf]
    %v888 = vld [vmem:[#allocation5 + $0x28] sm:$0xf]
    %v889 = vld [vmem:[#allocation5 + $0x2c] sm:$0xf]
    %v890 = vld [vmem:[#allocation5 + $0x30] sm:$0xf]
    %v891 = vld [vmem:[#allocation5 + $0x34] sm:$0xf]
    %v892 = vld [vmem:[#allocation5 + $0x38] sm:$0xf]
    %v893 = vld [vmem:[#allocation5 + $0x3c] sm:$0xf]
    %v894 = vld [vmem:[#allocation5 + $0x40] sm:$0xf]
    %v895 = vld [vmem:[#allocation5 + $0x44] sm:$0xf]
    %v896 = vld [vmem:[#allocation5 + $0x48] sm:$0xf]
    %v897 = vld [vmem:[#allocation5 + $0x4c] sm:$0xf]
    %v898 = vld [vmem:[#allocation5 + $0x50] sm:$0xf]
    %v899 = vld [vmem:[#allocation5 + $0x54] sm:$0xf]
    %v900 = vld [vmem:[#allocation5 + $0x58] sm:$0xf]
    %v901 = vld [vmem:[#allocation5 + $0x5c] sm:$0xf]
    %v902 = vld [vmem:[#allocation5 + $0x60] sm:$0xf]
    %v903 = vld [vmem:[#allocation5 + $0x64] sm:$0xf]
    %v904 = vld [vmem:[#allocation5 + $0x68] sm:$0xf]
    %v905 = vld [vmem:[#allocation5 + $0x6c] sm:$0xf]
    %v906 = vld [vmem:[#allocation5 + $0x70] sm:$0xf]
    %v907 = vld [vmem:[#allocation5 + $0x74] sm:$0xf]
    %v908 = vld [vmem:[#allocation5 + $0x78] sm:$0xf]
    %v909 = vld [vmem:[#allocation5 + $0x7c] sm:$0xf]
    %v910 = vld [vmem:[#allocation5 + $0x80] sm:$0xf]
    %v911 = vld [vmem:[#allocation5 + $0x84] sm:$0xf]
    %v912 = vld [vmem:[#allocation5 + $0x88] sm:$0xf]
    %v913 = vld [vmem:[#allocation5 + $0x8c] sm:$0xf]
    %v914 = vld [vmem:[#allocation5 + $0x90] sm:$0xf]
    %v915 = vld [vmem:[#allocation5 + $0x94] sm:$0xf]
    %v916 = vld [vmem:[#allocation5 + $0x98] sm:$0xf]
    %v917 = vld [vmem:[#allocation5 + $0x9c] sm:$0xf]
    %v918 = vld [vmem:[#allocation5 + $0xa0] sm:$0xf]
    %v919 = vld [vmem:[#allocation5 + $0xa4] sm:$0xf]
    %v920 = vld [vmem:[#allocation5 + $0xa8] sm:$0xf]
    %v921 = vld [vmem:[#allocation5 + $0xac] sm:$0xf]
    %v922 = vld [vmem:[#allocation5 + $0xb0] sm:$0xf]
    %v923 = vld [vmem:[#allocation5 + $0xb4] sm:$0xf]
    %v924 = vld [vmem:[#allocation5 + $0xb8] sm:$0xf]
    %v925 = vld [vmem:[#allocation5 + $0xbc] sm:$0xf]
    %v926 = vld [vmem:[#allocation5 + $0xc0] sm:$0xf]
    %v927 = vld [vmem:[#allocation5 + $0xc4] sm:$0xf]
    %v928 = vld [vmem:[#allocation5 + $0xc8] sm:$0xf]
    %v929 = vld [vmem:[#allocation5 + $0xcc] sm:$0xf]
    %v930 = vld [vmem:[#allocation5 + $0xd0] sm:$0xf]
    %v931 = vld [vmem:[#allocation5 + $0xd4] sm:$0xf]
    %v932 = vld [vmem:[#allocation5 + $0xd8] sm:$0xf]
    %v933 = vld [vmem:[#allocation5 + $0xdc] sm:$0xf]
    %v934 = vld [vmem:[#allocation5 + $0xe0] sm:$0xf]
    %v935 = vld [vmem:[#allocation5 + $0xe4] sm:$0xf]
    %v936 = vld [vmem:[#allocation5 + $0xe8] sm:$0xf]
    %v937 = vld [vmem:[#allocation5 + $0xec] sm:$0xf]
    %v938 = vld [vmem:[#allocation5 + $0xf0] sm:$0xf]
    %v939 = vld [vmem:[#allocation5 + $0xf4] sm:$0xf]
    %v940 = vld [vmem:[#allocation5 + $0xf8] sm:$0xf]
    %v941 = vld [vmem:[#allocation5 + $0xfc] sm:$0xf]
    %v942 = vld [vmem:[#allocation5 + $0x100] sm:$0xf]
    %v943 = vld [vmem:[#allocation5 + $0x104] sm:$0xf]
    %v944 = vld [vmem:[#allocation5 + $0x108] sm:$0xf]
    %v945 = vld [vmem:[#allocation5 + $0x10c] sm:$0xf]
    %v946 = vld [vmem:[#allocation5 + $0x110] sm:$0xf]
    %v947 = vld [vmem:[#allocation5 + $0x114] sm:$0xf]
    %v948 = vld [vmem:[#allocation5 + $0x118] sm:$0xf]
    %v949 = vld [vmem:[#allocation5 + $0x11c] sm:$0xf]
    %v950 = vld [vmem:[#allocation5 + $0x120] sm:$0xf]
    %v951 = vld [vmem:[#allocation5 + $0x124] sm:$0xf]
    %v952 = vld [vmem:[#allocation5 + $0x128] sm:$0xf]
    %v953 = vld [vmem:[#allocation5 + $0x12c] sm:$0xf]
    %v954 = vld [vmem:[#allocation5 + $0x130] sm:$0xf]
    %v955 = vld [vmem:[#allocation5 + $0x134] sm:$0xf]
    %v956 = vld [vmem:[#allocation5 + $0x138] sm:$0xf]
    %v957 = vld [vmem:[#allocation5 + $0x13c] sm:$0xf]
    %v958 = vld [vmem:[#allocation5 + $0x140] sm:$0xf]
    %v959 = vld [vmem:[#allocation5 + $0x144] sm:$0xf]
    %v960 = vld [vmem:[#allocation5 + $0x148] sm:$0xf]
    %v961 = vld [vmem:[#allocation5 + $0x14c] sm:$0xf]
    %v962 = vld [vmem:[#allocation5 + $0x150] sm:$0xf]
    %v963 = vld [vmem:[#allocation5 + $0x154] sm:$0xf]
    %v964 = vld [vmem:[#allocation5 + $0x158] sm:$0xf]
    %v965 = vld [vmem:[#allocation5 + $0x15c] sm:$0xf]
    %v966 = vld [vmem:[#allocation5 + $0x160] sm:$0xf]
    %v967 = vld [vmem:[#allocation5 + $0x164] sm:$0xf]
    %v968 = vld [vmem:[#allocation5 + $0x168] sm:$0xf]
    %v969 = vld [vmem:[#allocation5 + $0x16c] sm:$0xf]
    %v970 = vld [vmem:[#allocation5 + $0x170] sm:$0xf]
    %v971 = vld [vmem:[#allocation5 + $0x174] sm:$0xf]
    %v972 = vld [vmem:[#allocation5 + $0x178] sm:$0xf]
    %v973 = vld [vmem:[#allocation5 + $0x17c] sm:$0xf]
    %v974 = vld [vmem:[#allocation5 + $0x180] sm:$0xf]
    %v975 = vld [vmem:[#allocation5 + $0x184] sm:$0xf]
    %v976 = vld [vmem:[#allocation5 + $0x188] sm:$0xf]
    %v977 = vld [vmem:[#allocation5 + $0x18c] sm:$0xf]
    %v978 = vld [vmem:[#allocation5 + $0x190] sm:$0xf]
    %v979 = vld [vmem:[#allocation5 + $0x194] sm:$0xf]
    %v980 = vld [vmem:[#allocation5 + $0x198] sm:$0xf]
    %v981 = vld [vmem:[#allocation5 + $0x19c] sm:$0xf]
    %v982 = vld [vmem:[#allocation5 + $0x1a0] sm:$0xf]
    %v983 = vld [vmem:[#allocation5 + $0x1a4] sm:$0xf]
    %v984 = vld [vmem:[#allocation5 + $0x1a8] sm:$0xf]
    %v985 = vld [vmem:[#allocation5 + $0x1ac] sm:$0xf]
    %v986 = vld [vmem:[#allocation5 + $0x1b0] sm:$0xf]
    %v987 = vld [vmem:[#allocation5 + $0x1b4] sm:$0xf]
    %v988 = vld [vmem:[#allocation5 + $0x1b8] sm:$0xf]
    %v989 = vld [vmem:[#allocation5 + $0x1bc] sm:$0xf]
    %v990 = vld [vmem:[#allocation5 + $0x1c0] sm:$0xf]
    %v991 = vld [vmem:[#allocation5 + $0x1c4] sm:$0xf]
    %v992 = vld [vmem:[#allocation5 + $0x1c8] sm:$0xf]
    %v993 = vld [vmem:[#allocation5 + $0x1cc] sm:$0xf]
    %v994 = vld [vmem:[#allocation5 + $0x1d0] sm:$0xf]
    %v995 = vld [vmem:[#allocation5 + $0x1d4] sm:$0xf]
    %v996 = vld [vmem:[#allocation5 + $0x1d8] sm:$0xf]
    %v997 = vld [vmem:[#allocation5 + $0x1dc] sm:$0xf]
    %v998 = vld [vmem:[#allocation5 + $0x1e0] sm:$0xf]
    %v999 = vld [vmem:[#allocation5 + $0x1e4] sm:$0xf]
    %v1000 = vld [vmem:[#allocation5 + $0x1e8] sm:$0xf]
    %v1001 = vld [vmem:[#allocation5 + $0x1ec] sm:$0xf]
    %v1002 = vld [vmem:[#allocation5 + $0x1f0] sm:$0xf]
    %v1003 = vld [vmem:[#allocation5 + $0x1f4] sm:$0xf]
    %v1004 = vld [vmem:[#allocation5 + $0x1f8] sm:$0xf]
    %v1005 = vld [vmem:[#allocation5 + $0x1fc] sm:$0xf]
    %v1006 = vld [vmem:[#allocation5 + $0x200] sm:$0xf]
    %v1007 = vld [vmem:[#allocation5 + $0x204] sm:$0xf]
    %v1008 = vld [vmem:[#allocation5 + $0x208] sm:$0xf]
    %v1009 = vld [vmem:[#allocation5 + $0x20c] sm:$0xf]
    %v1010 = vld [vmem:[#allocation5 + $0x210] sm:$0xf]
    %v1011 = vld [vmem:[#allocation5 + $0x214] sm:$0xf]
    %v1012 = vld [vmem:[#allocation5 + $0x218] sm:$0xf]
    %v1013 = vld [vmem:[#allocation5 + $0x21c] sm:$0xf]
    %v1014 = vld [vmem:[#allocation5 + $0x220] sm:$0xf]
    %v1015 = vld [vmem:[#allocation5 + $0x224] sm:$0xf]
    %v1016 = vld [vmem:[#allocation5 + $0x228] sm:$0xf]
    %v1017 = vld [vmem:[#allocation5 + $0x22c] sm:$0xf]
    %v1018 = vld [vmem:[#allocation5 + $0x230] sm:$0xf]
    %v1019 = vld [vmem:[#allocation5 + $0x234] sm:$0xf]
    %v1020 = vld [vmem:[#allocation5 + $0x238] sm:$0xf]
    %v1021 = vld [vmem:[#allocation5 + $0x23c] sm:$0xf]
    %v1022 = vld [vmem:[%s2] sm:$0x1]
    %v1024 = vperm.slane %v1022, 0
    %v1170 = vunpack.c.l.b16 %v878
    %v1171 = vunpack.c.l.b16 %v879
    %v1172 = vunpack.c.l.b16 %v880
    %v1173 = vunpack.c.l.b16 %v881
    %v1174 = vunpack.c.l.b16 %v882
    %v1175 = vunpack.c.l.b16 %v883
    %v1176 = vunpack.c.l.b16 %v884
    %v1177 = vunpack.c.l.b16 %v885
    %v1178 = vunpack.c.l.b16 %v886
    %v1179 = vunpack.c.l.b16 %v887
    %v1180 = vunpack.c.l.b16 %v888
    %v1181 = vunpack.c.l.b16 %v889
    %v1182 = vunpack.c.l.b16 %v890
    %v1183 = vunpack.c.l.b16 %v891
    %v1184 = vunpack.c.l.b16 %v892
    %v1185 = vunpack.c.l.b16 %v893
    %v1186 = vunpack.c.l.b16 %v894
    %v1187 = vunpack.c.l.b16 %v895
    %v1188 = vunpack.c.l.b16 %v896
    %v1189 = vunpack.c.l.b16 %v897
    %v1190 = vunpack.c.l.b16 %v898
    %v1191 = vunpack.c.l.b16 %v899
    %v1192 = vunpack.c.l.b16 %v900
    %v1193 = vunpack.c.l.b16 %v901
    %v1194 = vunpack.c.l.b16 %v902
    %v1195 = vunpack.c.l.b16 %v903
    %v1196 = vunpack.c.l.b16 %v904
    %v1197 = vunpack.c.l.b16 %v905
    %v1198 = vunpack.c.l.b16 %v906
    %v1199 = vunpack.c.l.b16 %v907
    %v1200 = vunpack.c.l.b16 %v908
    %v1201 = vunpack.c.l.b16 %v909
    %v1202 = vunpack.c.l.b16 %v910
    %v1203 = vunpack.c.l.b16 %v911
    %v1204 = vunpack.c.l.b16 %v912
    %v1205 = vunpack.c.l.b16 %v913
    %v1206 = vunpack.c.l.b16 %v914
    %v1207 = vunpack.c.l.b16 %v915
    %v1208 = vunpack.c.l.b16 %v916
    %v1209 = vunpack.c.l.b16 %v917
    %v1210 = vunpack.c.l.b16 %v918
    %v1211 = vunpack.c.l.b16 %v919
    %v1212 = vunpack.c.l.b16 %v920
    %v1213 = vunpack.c.l.b16 %v921
    %v1214 = vunpack.c.l.b16 %v922
    %v1215 = vunpack.c.l.b16 %v923
    %v1216 = vunpack.c.l.b16 %v924
    %v1217 = vunpack.c.l.b16 %v925
    %v1218 = vunpack.c.l.b16 %v926
    %v1219 = vunpack.c.l.b16 %v927
    %v1220 = vunpack.c.l.b16 %v928
    %v1221 = vunpack.c.l.b16 %v929
    %v1222 = vunpack.c.l.b16 %v930
    %v1223 = vunpack.c.l.b16 %v931
    %v1224 = vunpack.c.l.b16 %v932
    %v1225 = vunpack.c.l.b16 %v933
    %v1226 = vunpack.c.l.b16 %v934
    %v1227 = vunpack.c.l.b16 %v935
    %v1228 = vunpack.c.l.b16 %v936
    %v1229 = vunpack.c.l.b16 %v937
    %v1230 = vunpack.c.l.b16 %v938
    %v1231 = vunpack.c.l.b16 %v939
    %v1232 = vunpack.c.l.b16 %v940
    %v1233 = vunpack.c.l.b16 %v941
    %v1234 = vunpack.c.l.b16 %v942
    %v1235 = vunpack.c.l.b16 %v943
    %v1236 = vunpack.c.l.b16 %v944
    %v1237 = vunpack.c.l.b16 %v945
    %v1238 = vunpack.c.l.b16 %v946
    %v1239 = vunpack.c.l.b16 %v947
    %v1240 = vunpack.c.l.b16 %v948
    %v1241 = vunpack.c.l.b16 %v949
    %v1242 = vunpack.c.l.b16 %v950
    %v1243 = vunpack.c.l.b16 %v951
    %v1244 = vunpack.c.l.b16 %v952
    %v1245 = vunpack.c.l.b16 %v953
    %v1246 = vunpack.c.l.b16 %v954
    %v1247 = vunpack.c.l.b16 %v955
    %v1248 = vunpack.c.l.b16 %v956
    %v1249 = vunpack.c.l.b16 %v957
    %v1250 = vunpack.c.l.b16 %v958
    %v1251 = vunpack.c.l.b16 %v959
    %v1252 = vunpack.c.l.b16 %v960
    %v1253 = vunpack.c.l.b16 %v961
    %v1254 = vunpack.c.l.b16 %v962
    %v1255 = vunpack.c.l.b16 %v963
    %v1256 = vunpack.c.l.b16 %v964
    %v1257 = vunpack.c.l.b16 %v965
    %v1258 = vunpack.c.l.b16 %v966
    %v1259 = vunpack.c.l.b16 %v967
    %v1260 = vunpack.c.l.b16 %v968
    %v1261 = vunpack.c.l.b16 %v969
    %v1262 = vunpack.c.l.b16 %v970
    %v1263 = vunpack.c.l.b16 %v971
    %v1264 = vunpack.c.l.b16 %v972
    %v1265 = vunpack.c.l.b16 %v973
    %v1266 = vunpack.c.l.b16 %v974
    %v1267 = vunpack.c.l.b16 %v975
    %v1268 = vunpack.c.l.b16 %v976
    %v1269 = vunpack.c.l.b16 %v977
    %v1270 = vunpack.c.l.b16 %v978
    %v1271 = vunpack.c.l.b16 %v979
    %v1272 = vunpack.c.l.b16 %v980
    %v1273 = vunpack.c.l.b16 %v981
    %v1274 = vunpack.c.l.b16 %v982
    %v1275 = vunpack.c.l.b16 %v983
    %v1276 = vunpack.c.l.b16 %v984
    %v1277 = vunpack.c.l.b16 %v985
    %v1278 = vunpack.c.l.b16 %v986
    %v1279 = vunpack.c.l.b16 %v987
    %v1280 = vunpack.c.l.b16 %v988
    %v1281 = vunpack.c.l.b16 %v989
    %v1282 = vunpack.c.l.b16 %v990
    %v1283 = vunpack.c.l.b16 %v991
    %v1284 = vunpack.c.l.b16 %v992
    %v1285 = vunpack.c.l.b16 %v993
    %v1286 = vunpack.c.l.b16 %v994
    %v1287 = vunpack.c.l.b16 %v995
    %v1288 = vunpack.c.l.b16 %v996
    %v1289 = vunpack.c.l.b16 %v997
    %v1290 = vunpack.c.l.b16 %v998
    %v1291 = vunpack.c.l.b16 %v999
    %v1292 = vunpack.c.l.b16 %v1000
    %v1293 = vunpack.c.l.b16 %v1001
    %v1294 = vunpack.c.l.b16 %v1002
    %v1295 = vunpack.c.l.b16 %v1003
    %v1296 = vunpack.c.l.b16 %v1004
    %v1297 = vunpack.c.l.b16 %v1005
    %v1298 = vunpack.c.l.b16 %v1006
    %v1299 = vunpack.c.l.b16 %v1007
    %v1300 = vunpack.c.l.b16 %v1008
    %v1301 = vunpack.c.l.b16 %v1009
    %v1302 = vunpack.c.l.b16 %v1010
    %v1303 = vunpack.c.l.b16 %v1011
    %v1304 = vunpack.c.l.b16 %v1012
    %v1305 = vunpack.c.l.b16 %v1013
    %v1306 = vunpack.c.l.b16 %v1014
    %v1307 = vunpack.c.l.b16 %v1015
    %v1308 = vunpack.c.l.b16 %v1016
    %v1309 = vunpack.c.l.b16 %v1017
    %v1310 = vunpack.c.l.b16 %v1018
    %v1311 = vunpack.c.l.b16 %v1019
    %v1312 = vunpack.c.l.b16 %v1020
    %v1313 = vunpack.c.l.b16 %v1021
    %v1314 = vpack.c.b16 %v1171, %v1170
    %v1315 = vpack.c.b16 %v1173, %v1172
    %v1316 = vpack.c.b16 %v1175, %v1174
    %v1317 = vpack.c.b16 %v1177, %v1176
    %v1318 = vpack.c.b16 %v1179, %v1178
    %v1319 = vpack.c.b16 %v1181, %v1180
    %v1320 = vpack.c.b16 %v1183, %v1182
    %v1321 = vpack.c.b16 %v1185, %v1184
    %v1322 = vpack.c.b16 %v1187, %v1186
    %v1323 = vpack.c.b16 %v1189, %v1188
    %v1324 = vpack.c.b16 %v1191, %v1190
    %v1325 = vpack.c.b16 %v1193, %v1192
    %v1326 = vpack.c.b16 %v1195, %v1194
    %v1327 = vpack.c.b16 %v1197, %v1196
    %v1328 = vpack.c.b16 %v1199, %v1198
    %v1329 = vpack.c.b16 %v1201, %v1200
    %v1330 = vpack.c.b16 %v1203, %v1202
    %v1331 = vpack.c.b16 %v1205, %v1204
    %v1332 = vpack.c.b16 %v1207, %v1206
    %v1333 = vpack.c.b16 %v1209, %v1208
    %v1334 = vpack.c.b16 %v1211, %v1210
    %v1335 = vpack.c.b16 %v1213, %v1212
    %v1336 = vpack.c.b16 %v1215, %v1214
    %v1337 = vpack.c.b16 %v1217, %v1216
    %v1338 = vpack.c.b16 %v1219, %v1218
    %v1339 = vpack.c.b16 %v1221, %v1220
    %v1340 = vpack.c.b16 %v1223, %v1222
    %v1341 = vpack.c.b16 %v1225, %v1224
    %v1342 = vpack.c.b16 %v1227, %v1226
    %v1343 = vpack.c.b16 %v1229, %v1228
    %v1344 = vpack.c.b16 %v1231, %v1230
    %v1345 = vpack.c.b16 %v1233, %v1232
    %v1346 = vpack.c.b16 %v1235, %v1234
    %v1347 = vpack.c.b16 %v1237, %v1236
    %v1348 = vpack.c.b16 %v1239, %v1238
    %v1349 = vpack.c.b16 %v1241, %v1240
    %v1350 = vpack.c.b16 %v1243, %v1242
    %v1351 = vpack.c.b16 %v1245, %v1244
    %v1352 = vpack.c.b16 %v1247, %v1246
    %v1353 = vpack.c.b16 %v1249, %v1248
    %v1354 = vpack.c.b16 %v1251, %v1250
    %v1355 = vpack.c.b16 %v1253, %v1252
    %v1356 = vpack.c.b16 %v1255, %v1254
    %v1357 = vpack.c.b16 %v1257, %v1256
    %v1358 = vpack.c.b16 %v1259, %v1258
    %v1359 = vpack.c.b16 %v1261, %v1260
    %v1360 = vpack.c.b16 %v1263, %v1262
    %v1361 = vpack.c.b16 %v1265, %v1264
    %v1362 = vpack.c.b16 %v1267, %v1266
    %v1363 = vpack.c.b16 %v1269, %v1268
    %v1364 = vpack.c.b16 %v1271, %v1270
    %v1365 = vpack.c.b16 %v1273, %v1272
    %v1366 = vpack.c.b16 %v1275, %v1274
    %v1367 = vpack.c.b16 %v1277, %v1276
    %v1368 = vpack.c.b16 %v1279, %v1278
    %v1369 = vpack.c.b16 %v1281, %v1280
    %v1370 = vpack.c.b16 %v1283, %v1282
    %v1371 = vpack.c.b16 %v1285, %v1284
    %v1372 = vpack.c.b16 %v1287, %v1286
    %v1373 = vpack.c.b16 %v1289, %v1288
    %v1374 = vpack.c.b16 %v1291, %v1290
    %v1375 = vpack.c.b16 %v1293, %v1292
    %v1376 = vpack.c.b16 %v1295, %v1294
    %v1377 = vpack.c.b16 %v1297, %v1296
    %v1378 = vpack.c.b16 %v1299, %v1298
    %v1379 = vpack.c.b16 %v1301, %v1300
    %v1380 = vpack.c.b16 %v1303, %v1302
    %v1381 = vpack.c.b16 %v1305, %v1304
    %v1382 = vpack.c.b16 %v1307, %v1306
    %v1383 = vpack.c.b16 %v1309, %v1308
    %v1384 = vpack.c.b16 %v1311, %v1310
    %v1385 = vpack.c.b16 %v1313, %v1312
    %1458 = vmatpush.bf16.msra.mxu0 %v1321
    %1459 = vmatpush.bf16.msra.mxu0 %v1320
    %1460 = vmatpush.bf16.msra.mxu0 %v1319
    %1461 = vmatpush.bf16.msra.mxu0 %v1318
    %1462 = vmatpush.bf16.msra.mxu0 %v1317
    %1463 = vmatpush.bf16.msra.mxu0 %v1316
    %1464 = vmatpush.bf16.msra.mxu0 %v1315
    %1465 = vmatpush.bf16.msra.mxu0 %v1314
    %1466 = vmatmul.bf16.gmra.mxu0 %v770
    %v1467 = vpop.f32.mrf.mxu0
    %v1468 = vadd.f32 %v1024, %v1467
    %v1469 = vpop.f32.mrf.mxu0
    %v1470 = vadd.f32 %v1024, %v1469
    %1471 = vmatmul.bf16.gmra.mxu0 %v776
    %v1472 = vpop.f32.mrf.mxu0
    %v1473 = vadd.f32 %v1024, %v1472
    %v1474 = vpop.f32.mrf.mxu0
    %v1475 = vadd.f32 %v1024, %v1474
    %1476 = vmatmul.bf16.gmra.mxu0 %v782
    %v1477 = vpop.f32.mrf.mxu0
    %v1478 = vadd.f32 %v1024, %v1477
    %v1479 = vpop.f32.mrf.mxu0
    %v1480 = vadd.f32 %v1024, %v1479
    %1481 = vmatmul.bf16.gmra.mxu0 %v788
    %v1482 = vpop.f32.mrf.mxu0
    %v1483 = vadd.f32 %v1024, %v1482
    %v1484 = vpop.f32.mrf.mxu0
    %v1485 = vadd.f32 %v1024, %v1484
    %1486 = vmatmul.bf16.gmra.mxu0 %v824
    %v1487 = vpop.f32.mrf.mxu0
    %v1488 = vadd.f32 %v1024, %v1487
    %v1489 = vpop.f32.mrf.mxu0
    %v1490 = vadd.f32 %v1024, %v1489
    %1491 = vmatmul.bf16.gmra.mxu0 %v830
    %v1492 = vpop.f32.mrf.mxu0
    %v1493 = vadd.f32 %v1024, %v1492
    %v1494 = vpop.f32.mrf.mxu0
    %v1495 = vadd.f32 %v1024, %v1494
    %1496 = vmatmul.bf16.gmra.mxu0 %v836
    %v1497 = vpop.f32.mrf.mxu0
    %v1498 = vadd.f32 %v1024, %v1497
    %v1499 = vpop.f32.mrf.mxu0
    %v1500 = vadd.f32 %v1024, %v1499
    %1501 = vmatmul.bf16.gmra.mxu0 %v842
    %v1502 = vpop.f32.mrf.mxu0
    %v1503 = vadd.f32 %v1024, %v1502
    %v1504 = vpop.f32.mrf.mxu0
    %v1505 = vadd.f32 %v1024, %v1504
    %1506 = vdwg.mxu0
    %1507 = vmatpush.bf16.msra.mxu0 %v1329
    %1508 = vmatpush.bf16.msra.mxu0 %v1328
    %1509 = vmatpush.bf16.msra.mxu0 %v1327
    %1510 = vmatpush.bf16.msra.mxu0 %v1326
    %1511 = vmatpush.bf16.msra.mxu0 %v1325
    %1512 = vmatpush.bf16.msra.mxu0 %v1324
    %1513 = vmatpush.bf16.msra.mxu0 %v1323
    %1514 = vmatpush.bf16.msra.mxu0 %v1322
    %1515 = vmatmul.bf16.gmra.mxu0 %v771
    %v1516 = vpop.f32.mrf.mxu0
    %v1517 = vadd.f32 %v1468, %v1516
    %v1518 = vpop.f32.mrf.mxu0
    %v1519 = vadd.f32 %v1470, %v1518
    %1520 = vmatmul.bf16.gmra.mxu0 %v777
    %v1521 = vpop.f32.mrf.mxu0
    %v1522 = vadd.f32 %v1473, %v1521
    %v1523 = vpop.f32.mrf.mxu0
    %v1524 = vadd.f32 %v1475, %v1523
    %1525 = vmatmul.bf16.gmra.mxu0 %v783
    %v1526 = vpop.f32.mrf.mxu0
    %v1527 = vadd.f32 %v1478, %v1526
    %v1528 = vpop.f32.mrf.mxu0
    %v1529 = vadd.f32 %v1480, %v1528
    %1530 = vmatmul.bf16.gmra.mxu0 %v789
    %v1531 = vpop.f32.mrf.mxu0
    %v1532 = vadd.f32 %v1483, %v1531
    %v1533 = vpop.f32.mrf.mxu0
    %v1534 = vadd.f32 %v1485, %v1533
    %1535 = vmatmul.bf16.gmra.mxu0 %v825
    %v1536 = vpop.f32.mrf.mxu0
    %v1537 = vadd.f32 %v1488, %v1536
    %v1538 = vpop.f32.mrf.mxu0
    %v1539 = vadd.f32 %v1490, %v1538
    %1540 = vmatmul.bf16.gmra.mxu0 %v831
    %v1541 = vpop.f32.mrf.mxu0
    %v1542 = vadd.f32 %v1493, %v1541
    %v1543 = vpop.f32.mrf.mxu0
    %v1544 = vadd.f32 %v1495, %v1543
    %1545 = vmatmul.bf16.gmra.mxu0 %v837
    %v1546 = vpop.f32.mrf.mxu0
    %v1547 = vadd.f32 %v1498, %v1546
    %v1548 = vpop.f32.mrf.mxu0
    %v1549 = vadd.f32 %v1500, %v1548
    %1550 = vmatmul.bf16.gmra.mxu0 %v843
    %v1551 = vpop.f32.mrf.mxu0
    %v1552 = vadd.f32 %v1503, %v1551
    %v1553 = vpop.f32.mrf.mxu0
    %v1554 = vadd.f32 %v1505, %v1553
    %1555 = vdwg.mxu0
    %1556 = vmatpush.bf16.msra.mxu0 %v1337
    %1557 = vmatpush.bf16.msra.mxu0 %v1336
    %1558 = vmatpush.bf16.msra.mxu0 %v1335
    %1559 = vmatpush.bf16.msra.mxu0 %v1334
    %1560 = vmatpush.bf16.msra.mxu0 %v1333
    %1561 = vmatpush.bf16.msra.mxu0 %v1332
    %1562 = vmatpush.bf16.msra.mxu0 %v1331
    %1563 = vmatpush.bf16.msra.mxu0 %v1330
    %1564 = vmatmul.bf16.gmra.mxu0 %v772
    %v1565 = vpop.f32.mrf.mxu0
    %v1566 = vadd.f32 %v1517, %v1565
    %v1567 = vpop.f32.mrf.mxu0
    %v1568 = vadd.f32 %v1519, %v1567
    %1569 = vmatmul.bf16.gmra.mxu0 %v778
    %v1570 = vpop.f32.mrf.mxu0
    %v1571 = vadd.f32 %v1522, %v1570
    %v1572 = vpop.f32.mrf.mxu0
    %v1573 = vadd.f32 %v1524, %v1572
    %1574 = vmatmul.bf16.gmra.mxu0 %v784
    %v1575 = vpop.f32.mrf.mxu0
    %v1576 = vadd.f32 %v1527, %v1575
    %v1577 = vpop.f32.mrf.mxu0
    %v1578 = vadd.f32 %v1529, %v1577
    %1579 = vmatmul.bf16.gmra.mxu0 %v790
    %v1580 = vpop.f32.mrf.mxu0
    %v1581 = vadd.f32 %v1532, %v1580
    %v1582 = vpop.f32.mrf.mxu0
    %v1583 = vadd.f32 %v1534, %v1582
    %1584 = vmatmul.bf16.gmra.mxu0 %v826
    %v1585 = vpop.f32.mrf.mxu0
    %v1586 = vadd.f32 %v1537, %v1585
    %v1587 = vpop.f32.mrf.mxu0
    %v1588 = vadd.f32 %v1539, %v1587
    %1589 = vmatmul.bf16.gmra.mxu0 %v832
    %v1590 = vpop.f32.mrf.mxu0
    %v1591 = vadd.f32 %v1542, %v1590
    %v1592 = vpop.f32.mrf.mxu0
    %v1593 = vadd.f32 %v1544, %v1592
    %1594 = vmatmul.bf16.gmra.mxu0 %v838
    %v1595 = vpop.f32.mrf.mxu0
    %v1596 = vadd.f32 %v1547, %v1595
    %v1597 = vpop.f32.mrf.mxu0
    %v1598 = vadd.f32 %v1549, %v1597
    %1599 = vmatmul.bf16.gmra.mxu0 %v844
    %v1600 = vpop.f32.mrf.mxu0
    %v1601 = vadd.f32 %v1552, %v1600
    %v1602 = vpop.f32.mrf.mxu0
    %v1603 = vadd.f32 %v1554, %v1602
    %1604 = vdwg.mxu0
    %1605 = vmatpush.bf16.msra.mxu0 %v1345
    %1606 = vmatpush.bf16.msra.mxu0 %v1344
    %1607 = vmatpush.bf16.msra.mxu0 %v1343
    %1608 = vmatpush.bf16.msra.mxu0 %v1342
    %1609 = vmatpush.bf16.msra.mxu0 %v1341
    %1610 = vmatpush.bf16.msra.mxu0 %v1340
    %1611 = vmatpush.bf16.msra.mxu0 %v1339
    %1612 = vmatpush.bf16.msra.mxu0 %v1338
    %1613 = vmatmul.bf16.gmra.mxu0 %v773
    %v1614 = vpop.f32.mrf.mxu0
    %v1615 = vadd.f32 %v1566, %v1614
    %v1616 = vpop.f32.mrf.mxu0
    %v1617 = vadd.f32 %v1568, %v1616
    %1618 = vmatmul.bf16.gmra.mxu0 %v779
    %v1619 = vpop.f32.mrf.mxu0
    %v1620 = vadd.f32 %v1571, %v1619
    %v1621 = vpop.f32.mrf.mxu0
    %v1622 = vadd.f32 %v1573, %v1621
    %1623 = vmatmul.bf16.gmra.mxu0 %v785
    %v1624 = vpop.f32.mrf.mxu0
    %v1625 = vadd.f32 %v1576, %v1624
    %v1626 = vpop.f32.mrf.mxu0
    %v1627 = vadd.f32 %v1578, %v1626
    %1628 = vmatmul.bf16.gmra.mxu0 %v791
    %v1629 = vpop.f32.mrf.mxu0
    %v1630 = vadd.f32 %v1581, %v1629
    %v1631 = vpop.f32.mrf.mxu0
    %v1632 = vadd.f32 %v1583, %v1631
    %1633 = vmatmul.bf16.gmra.mxu0 %v827
    %v1634 = vpop.f32.mrf.mxu0
    %v1635 = vadd.f32 %v1586, %v1634
    %v1636 = vpop.f32.mrf.mxu0
    %v1637 = vadd.f32 %v1588, %v1636
    %1638 = vmatmul.bf16.gmra.mxu0 %v833
    %v1639 = vpop.f32.mrf.mxu0
    %v1640 = vadd.f32 %v1591, %v1639
    %v1641 = vpop.f32.mrf.mxu0
    %v1642 = vadd.f32 %v1593, %v1641
    %1643 = vmatmul.bf16.gmra.mxu0 %v839
    %v1644 = vpop.f32.mrf.mxu0
    %v1645 = vadd.f32 %v1596, %v1644
    %v1646 = vpop.f32.mrf.mxu0
    %v1647 = vadd.f32 %v1598, %v1646
    %1648 = vmatmul.bf16.gmra.mxu0 %v845
    %v1649 = vpop.f32.mrf.mxu0
    %v1650 = vadd.f32 %v1601, %v1649
    %v1651 = vpop.f32.mrf.mxu0
    %v1652 = vadd.f32 %v1603, %v1651
    %1653 = vdwg.mxu0
    %1654 = vmatpush.bf16.msra.mxu0 %v1353
    %1655 = vmatpush.bf16.msra.mxu0 %v1352
    %1656 = vmatpush.bf16.msra.mxu0 %v1351
    %1657 = vmatpush.bf16.msra.mxu0 %v1350
    %1658 = vmatpush.bf16.msra.mxu0 %v1349
    %1659 = vmatpush.bf16.msra.mxu0 %v1348
    %1660 = vmatpush.bf16.msra.mxu0 %v1347
    %1661 = vmatpush.bf16.msra.mxu0 %v1346
    %1662 = vmatmul.bf16.gmra.mxu0 %v774
    %v1663 = vpop.f32.mrf.mxu0
    %v1664 = vadd.f32 %v1615, %v1663
    %v1665 = vpop.f32.mrf.mxu0
    %v1666 = vadd.f32 %v1617, %v1665
    %1667 = vmatmul.bf16.gmra.mxu0 %v780
    %v1668 = vpop.f32.mrf.mxu0
    %v1669 = vadd.f32 %v1620, %v1668
    %v1670 = vpop.f32.mrf.mxu0
    %v1671 = vadd.f32 %v1622, %v1670
    %1672 = vmatmul.bf16.gmra.mxu0 %v786
    %v1673 = vpop.f32.mrf.mxu0
    %v1674 = vadd.f32 %v1625, %v1673
    %v1675 = vpop.f32.mrf.mxu0
    %v1676 = vadd.f32 %v1627, %v1675
    %1677 = vmatmul.bf16.gmra.mxu0 %v792
    %v1678 = vpop.f32.mrf.mxu0
    %v1679 = vadd.f32 %v1630, %v1678
    %v1680 = vpop.f32.mrf.mxu0
    %v1681 = vadd.f32 %v1632, %v1680
    %1682 = vmatmul.bf16.gmra.mxu0 %v828
    %v1683 = vpop.f32.mrf.mxu0
    %v1684 = vadd.f32 %v1635, %v1683
    %v1685 = vpop.f32.mrf.mxu0
    %v1686 = vadd.f32 %v1637, %v1685
    %1687 = vmatmul.bf16.gmra.mxu0 %v834
    %v1688 = vpop.f32.mrf.mxu0
    %v1689 = vadd.f32 %v1640, %v1688
    %v1690 = vpop.f32.mrf.mxu0
    %v1691 = vadd.f32 %v1642, %v1690
    %1692 = vmatmul.bf16.gmra.mxu0 %v840
    %v1693 = vpop.f32.mrf.mxu0
    %v1694 = vadd.f32 %v1645, %v1693
    %v1695 = vpop.f32.mrf.mxu0
    %v1696 = vadd.f32 %v1647, %v1695
    %1697 = vmatmul.bf16.gmra.mxu0 %v846
    %v1698 = vpop.f32.mrf.mxu0
    %v1699 = vadd.f32 %v1650, %v1698
    %v1700 = vpop.f32.mrf.mxu0
    %v1701 = vadd.f32 %v1652, %v1700
    %1702 = vdwg.mxu0
    %1703 = vmatpush.bf16.msra.mxu0 %v1361
    %1704 = vmatpush.bf16.msra.mxu0 %v1360
    %1705 = vmatpush.bf16.msra.mxu0 %v1359
    %1706 = vmatpush.bf16.msra.mxu0 %v1358
    %1707 = vmatpush.bf16.msra.mxu0 %v1357
    %1708 = vmatpush.bf16.msra.mxu0 %v1356
    %1709 = vmatpush.bf16.msra.mxu0 %v1355
    %1710 = vmatpush.bf16.msra.mxu0 %v1354
    %1711 = vmatmul.bf16.gmra.mxu0 %v775
    %v1712 = vpop.f32.mrf.mxu0
    %v1713 = vadd.f32 %v1664, %v1712
    %v1714 = vpop.f32.mrf.mxu0
    %v1715 = vadd.f32 %v1666, %v1714
    %1716 = vmatmul.bf16.gmra.mxu0 %v781
    %v1717 = vpop.f32.mrf.mxu0
    %v1718 = vadd.f32 %v1669, %v1717
    %v1719 = vpop.f32.mrf.mxu0
    %v1720 = vadd.f32 %v1671, %v1719
    %1721 = vmatmul.bf16.gmra.mxu0 %v787
    %v1722 = vpop.f32.mrf.mxu0
    %v1723 = vadd.f32 %v1674, %v1722
    %v1724 = vpop.f32.mrf.mxu0
    %v1725 = vadd.f32 %v1676, %v1724
    %1726 = vmatmul.bf16.gmra.mxu0 %v793
    %v1727 = vpop.f32.mrf.mxu0
    %v1728 = vadd.f32 %v1679, %v1727
    %v1729 = vpop.f32.mrf.mxu0
    %v1730 = vadd.f32 %v1681, %v1729
    %1731 = vmatmul.bf16.gmra.mxu0 %v829
    %v1732 = vpop.f32.mrf.mxu0
    %v1733 = vadd.f32 %v1684, %v1732
    %v1734 = vpop.f32.mrf.mxu0
    %v1735 = vadd.f32 %v1686, %v1734
    %1736 = vmatmul.bf16.gmra.mxu0 %v835
    %v1737 = vpop.f32.mrf.mxu0
    %v1738 = vadd.f32 %v1689, %v1737
    %v1739 = vpop.f32.mrf.mxu0
    %v1740 = vadd.f32 %v1691, %v1739
    %1741 = vmatmul.bf16.gmra.mxu0 %v841
    %v1742 = vpop.f32.mrf.mxu0
    %v1743 = vadd.f32 %v1694, %v1742
    %v1744 = vpop.f32.mrf.mxu0
    %v1745 = vadd.f32 %v1696, %v1744
    %1746 = vmatmul.bf16.gmra.mxu0 %v847
    %v1747 = vpop.f32.mrf.mxu0
    %v1748 = vadd.f32 %v1699, %v1747
    %v1749 = vpop.f32.mrf.mxu0
    %v1750 = vadd.f32 %v1701, %v1749
    %1751 = vdwg.mxu0
    %1752 = vmatpush.bf16.msra.mxu0 %v1369
    %1753 = vmatpush.bf16.msra.mxu0 %v1368
    %1754 = vmatpush.bf16.msra.mxu0 %v1367
    %1755 = vmatpush.bf16.msra.mxu0 %v1366
    %1756 = vmatpush.bf16.msra.mxu0 %v1365
    %1757 = vmatpush.bf16.msra.mxu0 %v1364
    %1758 = vmatpush.bf16.msra.mxu0 %v1363
    %1759 = vmatpush.bf16.msra.mxu0 %v1362
    %1760 = vmatmul.bf16.gmra.mxu0 %v776
    %v1761 = vpop.f32.mrf.mxu0
    %v1762 = vadd.f32 %v1713, %v1761
    %v1763 = vpop.f32.mrf.mxu0
    %v1764 = vadd.f32 %v1715, %v1763
    %1765 = vmatmul.bf16.gmra.mxu0 %v782
    %v1766 = vpop.f32.mrf.mxu0
    %v1767 = vadd.f32 %v1718, %v1766
    %v1768 = vpop.f32.mrf.mxu0
    %v1769 = vadd.f32 %v1720, %v1768
    %1770 = vmatmul.bf16.gmra.mxu0 %v788
    %v1771 = vpop.f32.mrf.mxu0
    %v1772 = vadd.f32 %v1723, %v1771
    %v1773 = vpop.f32.mrf.mxu0
    %v1774 = vadd.f32 %v1725, %v1773
    %1775 = vmatmul.bf16.gmra.mxu0 %v794
    %v1776 = vpop.f32.mrf.mxu0
    %v1777 = vadd.f32 %v1728, %v1776
    %v1778 = vpop.f32.mrf.mxu0
    %v1779 = vadd.f32 %v1730, %v1778
    %1780 = vmatmul.bf16.gmra.mxu0 %v830
    %v1781 = vpop.f32.mrf.mxu0
    %v1782 = vadd.f32 %v1733, %v1781
    %v1783 = vpop.f32.mrf.mxu0
    %v1784 = vadd.f32 %v1735, %v1783
    %1785 = vmatmul.bf16.gmra.mxu0 %v836
    %v1786 = vpop.f32.mrf.mxu0
    %v1787 = vadd.f32 %v1738, %v1786
    %v1788 = vpop.f32.mrf.mxu0
    %v1789 = vadd.f32 %v1740, %v1788
    %1790 = vmatmul.bf16.gmra.mxu0 %v842
    %v1791 = vpop.f32.mrf.mxu0
    %v1792 = vadd.f32 %v1743, %v1791
    %v1793 = vpop.f32.mrf.mxu0
    %v1794 = vadd.f32 %v1745, %v1793
    %1795 = vmatmul.bf16.gmra.mxu0 %v848
    %v1796 = vpop.f32.mrf.mxu0
    %v1797 = vadd.f32 %v1748, %v1796
    %v1798 = vpop.f32.mrf.mxu0
    %v1799 = vadd.f32 %v1750, %v1798
    %1800 = vdwg.mxu0
    %1801 = vmatpush.bf16.msra.mxu0 %v1377
    %1802 = vmatpush.bf16.msra.mxu0 %v1376
    %1803 = vmatpush.bf16.msra.mxu0 %v1375
    %1804 = vmatpush.bf16.msra.mxu0 %v1374
    %1805 = vmatpush.bf16.msra.mxu0 %v1373
    %1806 = vmatpush.bf16.msra.mxu0 %v1372
    %1807 = vmatpush.bf16.msra.mxu0 %v1371
    %1808 = vmatpush.bf16.msra.mxu0 %v1370
    %1809 = vmatmul.bf16.gmra.mxu0 %v777
    %v1810 = vpop.f32.mrf.mxu0
    %v1811 = vadd.f32 %v1762, %v1810
    %v1812 = vpop.f32.mrf.mxu0
    %v1813 = vadd.f32 %v1764, %v1812
    %1814 = vmatmul.bf16.gmra.mxu0 %v783
    %v1815 = vpop.f32.mrf.mxu0
    %v1816 = vadd.f32 %v1767, %v1815
    %v1817 = vpop.f32.mrf.mxu0
    %v1818 = vadd.f32 %v1769, %v1817
    %1819 = vmatmul.bf16.gmra.mxu0 %v789
    %v1820 = vpop.f32.mrf.mxu0
    %v1821 = vadd.f32 %v1772, %v1820
    %v1822 = vpop.f32.mrf.mxu0
    %v1823 = vadd.f32 %v1774, %v1822
    %1824 = vmatmul.bf16.gmra.mxu0 %v795
    %v1825 = vpop.f32.mrf.mxu0
    %v1826 = vadd.f32 %v1777, %v1825
    %v1827 = vpop.f32.mrf.mxu0
    %v1828 = vadd.f32 %v1779, %v1827
    %1829 = vmatmul.bf16.gmra.mxu0 %v831
    %v1830 = vpop.f32.mrf.mxu0
    %v1831 = vadd.f32 %v1782, %v1830
    %v1832 = vpop.f32.mrf.mxu0
    %v1833 = vadd.f32 %v1784, %v1832
    %1834 = vmatmul.bf16.gmra.mxu0 %v837
    %v1835 = vpop.f32.mrf.mxu0
    %v1836 = vadd.f32 %v1787, %v1835
    %v1837 = vpop.f32.mrf.mxu0
    %v1838 = vadd.f32 %v1789, %v1837
    %1839 = vmatmul.bf16.gmra.mxu0 %v843
    %v1840 = vpop.f32.mrf.mxu0
    %v1841 = vadd.f32 %v1792, %v1840
    %v1842 = vpop.f32.mrf.mxu0
    %v1843 = vadd.f32 %v1794, %v1842
    %1844 = vmatmul.bf16.gmra.mxu0 %v849
    %v1845 = vpop.f32.mrf.mxu0
    %v1846 = vadd.f32 %v1797, %v1845
    %v1847 = vpop.f32.mrf.mxu0
    %v1848 = vadd.f32 %v1799, %v1847
    %1849 = vdwg.mxu0
    %1850 = vmatpush.bf16.msra.mxu0 %v1385
    %1851 = vmatpush.bf16.msra.mxu0 %v1384
    %1852 = vmatpush.bf16.msra.mxu0 %v1383
    %1853 = vmatpush.bf16.msra.mxu0 %v1382
    %1854 = vmatpush.bf16.msra.mxu0 %v1381
    %1855 = vmatpush.bf16.msra.mxu0 %v1380
    %1856 = vmatpush.bf16.msra.mxu0 %v1379
    %1857 = vmatpush.bf16.msra.mxu0 %v1378
    %1858 = vmatmul.bf16.gmra.mxu0 %v778
    %v1859 = vpop.f32.mrf.mxu0
    %v1860 = vadd.f32 %v1811, %v1859
    %v1861 = vpop.f32.mrf.mxu0
    %v1862 = vadd.f32 %v1813, %v1861
    %1863 = vmatmul.bf16.gmra.mxu0 %v784
    %v1864 = vpop.f32.mrf.mxu0
    %v1865 = vadd.f32 %v1816, %v1864
    %v1866 = vpop.f32.mrf.mxu0
    %v1867 = vadd.f32 %v1818, %v1866
    %1868 = vmatmul.bf16.gmra.mxu0 %v790
    %v1869 = vpop.f32.mrf.mxu0
    %v1870 = vadd.f32 %v1821, %v1869
    %v1871 = vpop.f32.mrf.mxu0
    %v1872 = vadd.f32 %v1823, %v1871
    %1873 = vmatmul.bf16.gmra.mxu0 %v796
    %v1874 = vpop.f32.mrf.mxu0
    %v1875 = vadd.f32 %v1826, %v1874
    %v1876 = vpop.f32.mrf.mxu0
    %v1877 = vadd.f32 %v1828, %v1876
    %1878 = vmatmul.bf16.gmra.mxu0 %v832
    %v1879 = vpop.f32.mrf.mxu0
    %v1880 = vadd.f32 %v1831, %v1879
    %v1881 = vpop.f32.mrf.mxu0
    %v1882 = vadd.f32 %v1833, %v1881
    %1883 = vmatmul.bf16.gmra.mxu0 %v838
    %v1884 = vpop.f32.mrf.mxu0
    %v1885 = vadd.f32 %v1836, %v1884
    %v1886 = vpop.f32.mrf.mxu0
    %v1887 = vadd.f32 %v1838, %v1886
    %1888 = vmatmul.bf16.gmra.mxu0 %v844
    %v1889 = vpop.f32.mrf.mxu0
    %v1890 = vadd.f32 %v1841, %v1889
    %v1891 = vpop.f32.mrf.mxu0
    %v1892 = vadd.f32 %v1843, %v1891
    %1893 = vmatmul.bf16.gmra.mxu0 %v850
    %v1894 = vpop.f32.mrf.mxu0
    %v1895 = vadd.f32 %v1846, %v1894
    %v1896 = vpop.f32.mrf.mxu0
    %v1897 = vadd.f32 %v1848, %v1896
    %1898 = vdwg.mxu0
    %v1899 = vmax.f32 %v1860, 0.0
    %v1900 = vmax.f32 %v1862, 0.0
    %v1901 = vmax.f32 %v1865, 0.0
    %v1902 = vmax.f32 %v1867, 0.0
    %v1903 = vmax.f32 %v1870, 0.0
    %v1904 = vmax.f32 %v1872, 0.0
    %v1905 = vmax.f32 %v1875, 0.0
    %v1906 = vmax.f32 %v1877, 0.0
    %v1907 = vmax.f32 %v1880, 0.0
    %v1908 = vmax.f32 %v1882, 0.0
    %v1909 = vmax.f32 %v1885, 0.0
    %v1910 = vmax.f32 %v1887, 0.0
    %v1911 = vmax.f32 %v1890, 0.0
    %v1912 = vmax.f32 %v1892, 0.0
    %v1913 = vmax.f32 %v1895, 0.0
    %v1914 = vmax.f32 %v1897, 0.0
    %v1915 = vpack.c.bf16 %v1899, %v1899
    %v1916 = vpack.c.bf16 %v1900, %v1900
    %v1917 = vpack.c.bf16 %v1901, %v1901
    %v1918 = vpack.c.bf16 %v1902, %v1902
    %v1919 = vpack.c.bf16 %v1903, %v1903
    %v1920 = vpack.c.bf16 %v1904, %v1904
    %v1921 = vpack.c.bf16 %v1905, %v1905
    %v1922 = vpack.c.bf16 %v1906, %v1906
    %v1923 = vpack.c.bf16 %v1907, %v1907
    %v1924 = vpack.c.bf16 %v1908, %v1908
    %v1925 = vpack.c.bf16 %v1909, %v1909
    %v1926 = vpack.c.bf16 %v1910, %v1910
    %v1927 = vpack.c.bf16 %v1911, %v1911
    %v1928 = vpack.c.bf16 %v1912, %v1912
    %v1929 = vpack.c.bf16 %v1913, %v1913
    %v1930 = vpack.c.bf16 %v1914, %v1914
    %v1932 = vshrl.u32 %v1915, 16
    %v1934 = vrot.slane %v1932, 7
    %v1935 = vshll.u32 %v1915, 16
    %v1937 = vor.u32 %v1934, %v1935
    %v1939 = vshrl.u32 %v1916, 16
    %v1941 = vrot.slane %v1939, 7
    %v1942 = vshll.u32 %v1916, 16
    %v1944 = vor.u32 %v1941, %v1942
    %v1946 = vshrl.u32 %v1917, 16
    %v1948 = vrot.slane %v1946, 7
    %v1949 = vshll.u32 %v1917, 16
    %v1951 = vor.u32 %v1948, %v1949
    %v1953 = vshrl.u32 %v1918, 16
    %v1955 = vrot.slane %v1953, 7
    %v1956 = vshll.u32 %v1918, 16
    %v1958 = vor.u32 %v1955, %v1956
    %v1960 = vshrl.u32 %v1919, 16
    %v1962 = vrot.slane %v1960, 7
    %v1963 = vshll.u32 %v1919, 16
    %v1965 = vor.u32 %v1962, %v1963
    %v1967 = vshrl.u32 %v1920, 16
    %v1969 = vrot.slane %v1967, 7
    %v1970 = vshll.u32 %v1920, 16
    %v1972 = vor.u32 %v1969, %v1970
    %v1974 = vshrl.u32 %v1921, 16
    %v1976 = vrot.slane %v1974, 7
    %v1977 = vshll.u32 %v1921, 16
    %v1979 = vor.u32 %v1976, %v1977
    %v1981 = vshrl.u32 %v1922, 16
    %v1983 = vrot.slane %v1981, 7
    %v1984 = vshll.u32 %v1922, 16
    %v1986 = vor.u32 %v1983, %v1984
    %v1995 = vsel %vm303, 0, %v1937
    %v1996 = vsel %vm303, 0, %v1944
    %v1997 = vsel %vm303, 0, %v1951
    %v1998 = vsel %vm303, 0, %v1958
    %v1999 = vsel %vm303, 0, %v1965
    %v2000 = vsel %vm303, 0, %v1972
    %v2001 = vsel %vm303, 0, %v1979
    %v2002 = vsel %vm303, 0, %v1986
    %v2003 = vsel %vm315, %v1995, 0
    %v2004 = vsel %vm315, %v1996, 0
    %v2005 = vsel %vm315, %v1997, 0
    %v2006 = vsel %vm315, %v1998, 0
    %v2007 = vsel %vm315, %v1999, 0
    %v2008 = vsel %vm315, %v2000, 0
    %v2009 = vsel %vm315, %v2001, 0
    %v2010 = vsel %vm315, %v2002, 0
    %v2012 = vshrl.u32 %v2003, 16
    %v2014 = vshll.u32 %v2003, 16
    %v2016 = vrot.slane %v2014, 1
    %v2017 = vor.u32 %v2012, %v2016
    %v2019 = vshrl.u32 %v2004, 16
    %v2021 = vshll.u32 %v2004, 16
    %v2023 = vrot.slane %v2021, 1
    %v2024 = vor.u32 %v2019, %v2023
    %v2026 = vshrl.u32 %v2005, 16
    %v2028 = vshll.u32 %v2005, 16
    %v2030 = vrot.slane %v2028, 1
    %v2031 = vor.u32 %v2026, %v2030
    %v2033 = vshrl.u32 %v2006, 16
    %v2035 = vshll.u32 %v2006, 16
    %v2037 = vrot.slane %v2035, 1
    %v2038 = vor.u32 %v2033, %v2037
    %v2040 = vshrl.u32 %v2007, 16
    %v2042 = vshll.u32 %v2007, 16
    %v2044 = vrot.slane %v2042, 1
    %v2045 = vor.u32 %v2040, %v2044
    %v2047 = vshrl.u32 %v2008, 16
    %v2049 = vshll.u32 %v2008, 16
    %v2051 = vrot.slane %v2049, 1
    %v2052 = vor.u32 %v2047, %v2051
    %v2054 = vshrl.u32 %v2009, 16
    %v2056 = vshll.u32 %v2009, 16
    %v2058 = vrot.slane %v2056, 1
    %v2059 = vor.u32 %v2054, %v2058
    %v2067 = vrot.slane %v2003, 1
    %v2068 = vrot.slane %v2004, 1
    %v2069 = vrot.slane %v2005, 1
    %v2070 = vrot.slane %v2006, 1
    %v2071 = vrot.slane %v2007, 1
    %v2072 = vrot.slane %v2008, 1
    %v2073 = vrot.slane %v2009, 1
    %v2075 = vshrl.u32 %v2010, 16
    %v2077 = vshll.u32 %v2010, 16
    %v2079 = vrot.slane %v2077, 1
    %v2080 = vor.u32 %v2075, %v2079
    %v2082 = vrot.slane %v2010, 1
    %v2083 = vunpack.c.l.b16 %v2003
    %v2084 = vunpack.c.l.b16 %v2017
    %v2085 = vunpack.c.l.b16 %v2067
    %v2086 = vunpack.c.l.b16 %v2004
    %v2087 = vunpack.c.l.b16 %v2024
    %v2088 = vunpack.c.l.b16 %v2068
    %v2089 = vunpack.c.l.b16 %v2005
    %v2090 = vunpack.c.l.b16 %v2031
    %v2091 = vunpack.c.l.b16 %v2069
    %v2092 = vunpack.c.l.b16 %v2006
    %v2093 = vunpack.c.l.b16 %v2038
    %v2094 = vunpack.c.l.b16 %v2070
    %v2095 = vunpack.c.l.b16 %v2007
    %v2096 = vunpack.c.l.b16 %v2045
    %v2097 = vunpack.c.l.b16 %v2071
    %v2098 = vunpack.c.l.b16 %v2008
    %v2099 = vunpack.c.l.b16 %v2052
    %v2100 = vunpack.c.l.b16 %v2072
    %v2101 = vunpack.c.l.b16 %v2009
    %v2102 = vunpack.c.l.b16 %v2059
    %v2103 = vunpack.c.l.b16 %v2073
    %v2104 = vunpack.c.l.b16 %v2010
    %v2105 = vunpack.c.l.b16 %v2080
    %v2106 = vunpack.c.l.b16 %v2082
    %v2108 = vshrl.u32 %v1923, 16
    %v2110 = vrot.slane %v2108, 7
    %v2111 = vshll.u32 %v1923, 16
    %v2113 = vor.u32 %v2110, %v2111
    %v2115 = vshrl.u32 %v1924, 16
    %v2117 = vrot.slane %v2115, 7
    %v2118 = vshll.u32 %v1924, 16
    %v2120 = vor.u32 %v2117, %v2118
    %v2122 = vshrl.u32 %v1925, 16
    %v2124 = vrot.slane %v2122, 7
    %v2125 = vshll.u32 %v1925, 16
    %v2127 = vor.u32 %v2124, %v2125
    %v2129 = vshrl.u32 %v1926, 16
    %v2131 = vrot.slane %v2129, 7
    %v2132 = vshll.u32 %v1926, 16
    %v2134 = vor.u32 %v2131, %v2132
    %v2136 = vshrl.u32 %v1927, 16
    %v2138 = vrot.slane %v2136, 7
    %v2139 = vshll.u32 %v1927, 16
    %v2141 = vor.u32 %v2138, %v2139
    %v2143 = vshrl.u32 %v1928, 16
    %v2145 = vrot.slane %v2143, 7
    %v2146 = vshll.u32 %v1928, 16
    %v2148 = vor.u32 %v2145, %v2146
    %v2150 = vshrl.u32 %v1929, 16
    %v2152 = vrot.slane %v2150, 7
    %v2153 = vshll.u32 %v1929, 16
    %v2155 = vor.u32 %v2152, %v2153
    %v2157 = vshrl.u32 %v1930, 16
    %v2159 = vrot.slane %v2157, 7
    %v2160 = vshll.u32 %v1930, 16
    %v2162 = vor.u32 %v2159, %v2160
    %v2171 = vsel %vm303, 0, %v2113
    %v2172 = vsel %vm303, 0, %v2120
    %v2173 = vsel %vm303, 0, %v2127
    %v2174 = vsel %vm303, 0, %v2134
    %v2175 = vsel %vm303, 0, %v2141
    %v2176 = vsel %vm303, 0, %v2148
    %v2177 = vsel %vm303, 0, %v2155
    %v2178 = vsel %vm303, 0, %v2162
    %v2179 = vsel %vm315, %v2171, 0
    %v2180 = vsel %vm315, %v2172, 0
    %v2181 = vsel %vm315, %v2173, 0
    %v2182 = vsel %vm315, %v2174, 0
    %v2183 = vsel %vm315, %v2175, 0
    %v2184 = vsel %vm315, %v2176, 0
    %v2185 = vsel %vm315, %v2177, 0
    %v2186 = vsel %vm315, %v2178, 0
    %v2188 = vshrl.u32 %v2179, 16
    %v2190 = vshll.u32 %v2179, 16
    %v2192 = vrot.slane %v2190, 1
    %v2193 = vor.u32 %v2188, %v2192
    %v2195 = vshrl.u32 %v2180, 16
    %v2197 = vshll.u32 %v2180, 16
    %v2199 = vrot.slane %v2197, 1
    %v2200 = vor.u32 %v2195, %v2199
    %v2202 = vshrl.u32 %v2181, 16
    %v2204 = vshll.u32 %v2181, 16
    %v2206 = vrot.slane %v2204, 1
    %v2207 = vor.u32 %v2202, %v2206
    %v2209 = vshrl.u32 %v2182, 16
    %v2211 = vshll.u32 %v2182, 16
    %v2213 = vrot.slane %v2211, 1
    %v2214 = vor.u32 %v2209, %v2213
    %v2216 = vshrl.u32 %v2183, 16
    %v2218 = vshll.u32 %v2183, 16
    %v2220 = vrot.slane %v2218, 1
    %v2221 = vor.u32 %v2216, %v2220
    %v2223 = vshrl.u32 %v2184, 16
    %v2225 = vshll.u32 %v2184, 16
    %v2227 = vrot.slane %v2225, 1
    %v2228 = vor.u32 %v2223, %v2227
    %v2230 = vshrl.u32 %v2185, 16
    %v2232 = vshll.u32 %v2185, 16
    %v2234 = vrot.slane %v2232, 1
    %v2235 = vor.u32 %v2230, %v2234
    %v2243 = vrot.slane %v2179, 1
    %v2244 = vrot.slane %v2180, 1
    %v2245 = vrot.slane %v2181, 1
    %v2246 = vrot.slane %v2182, 1
    %v2247 = vrot.slane %v2183, 1
    %v2248 = vrot.slane %v2184, 1
    %v2249 = vrot.slane %v2185, 1
    %v2251 = vshrl.u32 %v2186, 16
    %v2253 = vshll.u32 %v2186, 16
    %v2255 = vrot.slane %v2253, 1
    %v2256 = vor.u32 %v2251, %v2255
    %v2258 = vrot.slane %v2186, 1
    %v2259 = vunpack.c.l.b16 %v2179
    %v2260 = vunpack.c.l.b16 %v2193
    %v2261 = vunpack.c.l.b16 %v2243
    %v2262 = vunpack.c.l.b16 %v2180
    %v2263 = vunpack.c.l.b16 %v2200
    %v2264 = vunpack.c.l.b16 %v2244
    %v2265 = vunpack.c.l.b16 %v2181
    %v2266 = vunpack.c.l.b16 %v2207
    %v2267 = vunpack.c.l.b16 %v2245
    %v2268 = vunpack.c.l.b16 %v2182
    %v2269 = vunpack.c.l.b16 %v2214
    %v2270 = vunpack.c.l.b16 %v2246
    %v2271 = vunpack.c.l.b16 %v2183
    %v2272 = vunpack.c.l.b16 %v2221
    %v2273 = vunpack.c.l.b16 %v2247
    %v2274 = vunpack.c.l.b16 %v2184
    %v2275 = vunpack.c.l.b16 %v2228
    %v2276 = vunpack.c.l.b16 %v2248
    %v2277 = vunpack.c.l.b16 %v2185
    %v2278 = vunpack.c.l.b16 %v2235
    %v2279 = vunpack.c.l.b16 %v2249
    %v2280 = vunpack.c.l.b16 %v2186
    %v2281 = vunpack.c.l.b16 %v2256
    %v2282 = vunpack.c.l.b16 %v2258
    %v2283 = vpack.c.b16 %v2083, %v406
    %v2284 = vpack.c.b16 %v2084, %v407
    %v2285 = vpack.c.b16 %v2085, %v408
    %v2286 = vpack.c.b16 %v2086, %v2083
    %v2287 = vpack.c.b16 %v2087, %v2084
    %v2288 = vpack.c.b16 %v2088, %v2085
    %v2289 = vpack.c.b16 %v2089, %v2086
    %v2290 = vpack.c.b16 %v2090, %v2087
    %v2291 = vpack.c.b16 %v2091, %v2088
    %v2292 = vpack.c.b16 %v2092, %v2089
    %v2293 = vpack.c.b16 %v2093, %v2090
    %v2294 = vpack.c.b16 %v2094, %v2091
    %v2295 = vpack.c.b16 %v2095, %v2092
    %v2296 = vpack.c.b16 %v2096, %v2093
    %v2297 = vpack.c.b16 %v2097, %v2094
    %v2298 = vpack.c.b16 %v2098, %v2095
    %v2299 = vpack.c.b16 %v2099, %v2096
    %v2300 = vpack.c.b16 %v2100, %v2097
    %v2301 = vpack.c.b16 %v2101, %v2098
    %v2302 = vpack.c.b16 %v2102, %v2099
    %v2303 = vpack.c.b16 %v2103, %v2100
    %v2304 = vpack.c.b16 %v2104, %v2101
    %v2305 = vpack.c.b16 %v2105, %v2102
    %v2306 = vpack.c.b16 %v2106, %v2103
    %v2307 = vpack.c.b16 %v406, %v2104
    %v2308 = vpack.c.b16 %v407, %v2105
    %v2309 = vpack.c.b16 %v408, %v2106
    %v2337 = vpack.c.b16 %v2259, %v406
    %v2338 = vpack.c.b16 %v2260, %v407
    %v2339 = vpack.c.b16 %v2261, %v408
    %v2340 = vpack.c.b16 %v2262, %v2259
    %v2341 = vpack.c.b16 %v2263, %v2260
    %v2342 = vpack.c.b16 %v2264, %v2261
    %v2343 = vpack.c.b16 %v2265, %v2262
    %v2344 = vpack.c.b16 %v2266, %v2263
    %v2345 = vpack.c.b16 %v2267, %v2264
    %v2346 = vpack.c.b16 %v2268, %v2265
    %v2347 = vpack.c.b16 %v2269, %v2266
    %v2348 = vpack.c.b16 %v2270, %v2267
    %v2349 = vpack.c.b16 %v2271, %v2268
    %v2350 = vpack.c.b16 %v2272, %v2269
    %v2351 = vpack.c.b16 %v2273, %v2270
    %v2352 = vpack.c.b16 %v2274, %v2271
    %v2353 = vpack.c.b16 %v2275, %v2272
    %v2354 = vpack.c.b16 %v2276, %v2273
    %v2355 = vpack.c.b16 %v2277, %v2274
    %v2356 = vpack.c.b16 %v2278, %v2275
    %v2357 = vpack.c.b16 %v2279, %v2276
    %v2358 = vpack.c.b16 %v2280, %v2277
    %v2359 = vpack.c.b16 %v2281, %v2278
    %v2360 = vpack.c.b16 %v2282, %v2279
    %v2361 = vpack.c.b16 %v406, %v2280
    %v2362 = vpack.c.b16 %v407, %v2281
    %v2363 = vpack.c.b16 %v408, %v2282
    %v2391 = vld [vmem:[#allocation7] sm:$0xf]
    %v2392 = vld [vmem:[#allocation7 + $0x4] sm:$0xf]
    %v2393 = vld [vmem:[#allocation7 + $0x8] sm:$0xf]
    %v2394 = vld [vmem:[#allocation7 + $0xc] sm:$0xf]
    %v2395 = vld [vmem:[#allocation7 + $0x10] sm:$0xf]
    %v2396 = vld [vmem:[#allocation7 + $0x14] sm:$0xf]
    %v2397 = vld [vmem:[#allocation7 + $0x18] sm:$0xf]
    %v2398 = vld [vmem:[#allocation7 + $0x1c] sm:$0xf]
    %v2399 = vld [vmem:[#allocation7 + $0x20] sm:$0xf]
    %v2400 = vld [vmem:[#allocation7 + $0x24] sm:$0xf]
    %v2401 = vld [vmem:[#allocation7 + $0x28] sm:$0xf]
    %v2402 = vld [vmem:[#allocation7 + $0x2c] sm:$0xf]
    %v2403 = vld [vmem:[#allocation7 + $0x30] sm:$0xf]
    %v2404 = vld [vmem:[#allocation7 + $0x34] sm:$0xf]
    %v2405 = vld [vmem:[#allocation7 + $0x38] sm:$0xf]
    %v2406 = vld [vmem:[#allocation7 + $0x3c] sm:$0xf]
    %v2407 = vld [vmem:[#allocation7 + $0x40] sm:$0xf]
    %v2408 = vld [vmem:[#allocation7 + $0x44] sm:$0xf]
    %v2409 = vld [vmem:[#allocation7 + $0x48] sm:$0xf]
    %v2410 = vld [vmem:[#allocation7 + $0x4c] sm:$0xf]
    %v2411 = vld [vmem:[#allocation7 + $0x50] sm:$0xf]
    %v2412 = vld [vmem:[#allocation7 + $0x54] sm:$0xf]
    %v2413 = vld [vmem:[#allocation7 + $0x58] sm:$0xf]
    %v2414 = vld [vmem:[#allocation7 + $0x5c] sm:$0xf]
    %v2415 = vld [vmem:[#allocation7 + $0x60] sm:$0xf]
    %v2416 = vld [vmem:[#allocation7 + $0x64] sm:$0xf]
    %v2417 = vld [vmem:[#allocation7 + $0x68] sm:$0xf]
    %v2418 = vld [vmem:[#allocation7 + $0x6c] sm:$0xf]
    %v2419 = vld [vmem:[#allocation7 + $0x70] sm:$0xf]
    %v2420 = vld [vmem:[#allocation7 + $0x74] sm:$0xf]
    %v2421 = vld [vmem:[#allocation7 + $0x78] sm:$0xf]
    %v2422 = vld [vmem:[#allocation7 + $0x7c] sm:$0xf]
    %v2423 = vld [vmem:[#allocation7 + $0x80] sm:$0xf]
    %v2424 = vld [vmem:[#allocation7 + $0x84] sm:$0xf]
    %v2425 = vld [vmem:[#allocation7 + $0x88] sm:$0xf]
    %v2426 = vld [vmem:[#allocation7 + $0x8c] sm:$0xf]
    %v2427 = vld [vmem:[#allocation7 + $0x90] sm:$0xf]
    %v2428 = vld [vmem:[#allocation7 + $0x94] sm:$0xf]
    %v2429 = vld [vmem:[#allocation7 + $0x98] sm:$0xf]
    %v2430 = vld [vmem:[#allocation7 + $0x9c] sm:$0xf]
    %v2431 = vld [vmem:[#allocation7 + $0xa0] sm:$0xf]
    %v2432 = vld [vmem:[#allocation7 + $0xa4] sm:$0xf]
    %v2433 = vld [vmem:[#allocation7 + $0xa8] sm:$0xf]
    %v2434 = vld [vmem:[#allocation7 + $0xac] sm:$0xf]
    %v2435 = vld [vmem:[#allocation7 + $0xb0] sm:$0xf]
    %v2436 = vld [vmem:[#allocation7 + $0xb4] sm:$0xf]
    %v2437 = vld [vmem:[#allocation7 + $0xb8] sm:$0xf]
    %v2438 = vld [vmem:[#allocation7 + $0xbc] sm:$0xf]
    %v2439 = vld [vmem:[#allocation7 + $0xc0] sm:$0xf]
    %v2440 = vld [vmem:[#allocation7 + $0xc4] sm:$0xf]
    %v2441 = vld [vmem:[#allocation7 + $0xc8] sm:$0xf]
    %v2442 = vld [vmem:[#allocation7 + $0xcc] sm:$0xf]
    %v2443 = vld [vmem:[#allocation7 + $0xd0] sm:$0xf]
    %v2444 = vld [vmem:[#allocation7 + $0xd4] sm:$0xf]
    %v2445 = vld [vmem:[#allocation7 + $0xd8] sm:$0xf]
    %v2446 = vld [vmem:[#allocation7 + $0xdc] sm:$0xf]
    %v2447 = vld [vmem:[#allocation7 + $0xe0] sm:$0xf]
    %v2448 = vld [vmem:[#allocation7 + $0xe4] sm:$0xf]
    %v2449 = vld [vmem:[#allocation7 + $0xe8] sm:$0xf]
    %v2450 = vld [vmem:[#allocation7 + $0xec] sm:$0xf]
    %v2451 = vld [vmem:[#allocation7 + $0xf0] sm:$0xf]
    %v2452 = vld [vmem:[#allocation7 + $0xf4] sm:$0xf]
    %v2453 = vld [vmem:[#allocation7 + $0xf8] sm:$0xf]
    %v2454 = vld [vmem:[#allocation7 + $0xfc] sm:$0xf]
    %v2455 = vld [vmem:[#allocation7 + $0x100] sm:$0xf]
    %v2456 = vld [vmem:[#allocation7 + $0x104] sm:$0xf]
    %v2457 = vld [vmem:[#allocation7 + $0x108] sm:$0xf]
    %v2458 = vld [vmem:[#allocation7 + $0x10c] sm:$0xf]
    %v2459 = vld [vmem:[#allocation7 + $0x110] sm:$0xf]
    %v2460 = vld [vmem:[#allocation7 + $0x114] sm:$0xf]
    %v2461 = vld [vmem:[#allocation7 + $0x118] sm:$0xf]
    %v2462 = vld [vmem:[#allocation7 + $0x11c] sm:$0xf]
    %v2463 = vld [vmem:[#allocation7 + $0x120] sm:$0xf]
    %v2464 = vld [vmem:[#allocation7 + $0x124] sm:$0xf]
    %v2465 = vld [vmem:[#allocation7 + $0x128] sm:$0xf]
    %v2466 = vld [vmem:[#allocation7 + $0x12c] sm:$0xf]
    %v2467 = vld [vmem:[#allocation7 + $0x130] sm:$0xf]
    %v2468 = vld [vmem:[#allocation7 + $0x134] sm:$0xf]
    %v2469 = vld [vmem:[#allocation7 + $0x138] sm:$0xf]
    %v2470 = vld [vmem:[#allocation7 + $0x13c] sm:$0xf]
    %v2471 = vld [vmem:[#allocation7 + $0x140] sm:$0xf]
    %v2472 = vld [vmem:[#allocation7 + $0x144] sm:$0xf]
    %v2473 = vld [vmem:[#allocation7 + $0x148] sm:$0xf]
    %v2474 = vld [vmem:[#allocation7 + $0x14c] sm:$0xf]
    %v2475 = vld [vmem:[#allocation7 + $0x150] sm:$0xf]
    %v2476 = vld [vmem:[#allocation7 + $0x154] sm:$0xf]
    %v2477 = vld [vmem:[#allocation7 + $0x158] sm:$0xf]
    %v2478 = vld [vmem:[#allocation7 + $0x15c] sm:$0xf]
    %v2479 = vld [vmem:[#allocation7 + $0x160] sm:$0xf]
    %v2480 = vld [vmem:[#allocation7 + $0x164] sm:$0xf]
    %v2481 = vld [vmem:[#allocation7 + $0x168] sm:$0xf]
    %v2482 = vld [vmem:[#allocation7 + $0x16c] sm:$0xf]
    %v2483 = vld [vmem:[#allocation7 + $0x170] sm:$0xf]
    %v2484 = vld [vmem:[#allocation7 + $0x174] sm:$0xf]
    %v2485 = vld [vmem:[#allocation7 + $0x178] sm:$0xf]
    %v2486 = vld [vmem:[#allocation7 + $0x17c] sm:$0xf]
    %v2487 = vld [vmem:[#allocation7 + $0x180] sm:$0xf]
    %v2488 = vld [vmem:[#allocation7 + $0x184] sm:$0xf]
    %v2489 = vld [vmem:[#allocation7 + $0x188] sm:$0xf]
    %v2490 = vld [vmem:[#allocation7 + $0x18c] sm:$0xf]
    %v2491 = vld [vmem:[#allocation7 + $0x190] sm:$0xf]
    %v2492 = vld [vmem:[#allocation7 + $0x194] sm:$0xf]
    %v2493 = vld [vmem:[#allocation7 + $0x198] sm:$0xf]
    %v2494 = vld [vmem:[#allocation7 + $0x19c] sm:$0xf]
    %v2495 = vld [vmem:[#allocation7 + $0x1a0] sm:$0xf]
    %v2496 = vld [vmem:[#allocation7 + $0x1a4] sm:$0xf]
    %v2497 = vld [vmem:[#allocation7 + $0x1a8] sm:$0xf]
    %v2498 = vld [vmem:[#allocation7 + $0x1ac] sm:$0xf]
    %v2499 = vld [vmem:[#allocation7 + $0x1b0] sm:$0xf]
    %v2500 = vld [vmem:[#allocation7 + $0x1b4] sm:$0xf]
    %v2501 = vld [vmem:[#allocation7 + $0x1b8] sm:$0xf]
    %v2502 = vld [vmem:[#allocation7 + $0x1bc] sm:$0xf]
    %v2503 = vld [vmem:[#allocation7 + $0x1c0] sm:$0xf]
    %v2504 = vld [vmem:[#allocation7 + $0x1c4] sm:$0xf]
    %v2505 = vld [vmem:[#allocation7 + $0x1c8] sm:$0xf]
    %v2506 = vld [vmem:[#allocation7 + $0x1cc] sm:$0xf]
    %v2507 = vld [vmem:[#allocation7 + $0x1d0] sm:$0xf]
    %v2508 = vld [vmem:[#allocation7 + $0x1d4] sm:$0xf]
    %v2509 = vld [vmem:[#allocation7 + $0x1d8] sm:$0xf]
    %v2510 = vld [vmem:[#allocation7 + $0x1dc] sm:$0xf]
    %v2511 = vld [vmem:[#allocation7 + $0x1e0] sm:$0xf]
    %v2512 = vld [vmem:[#allocation7 + $0x1e4] sm:$0xf]
    %v2513 = vld [vmem:[#allocation7 + $0x1e8] sm:$0xf]
    %v2514 = vld [vmem:[#allocation7 + $0x1ec] sm:$0xf]
    %v2515 = vld [vmem:[#allocation7 + $0x1f0] sm:$0xf]
    %v2516 = vld [vmem:[#allocation7 + $0x1f4] sm:$0xf]
    %v2517 = vld [vmem:[#allocation7 + $0x1f8] sm:$0xf]
    %v2518 = vld [vmem:[#allocation7 + $0x1fc] sm:$0xf]
    %v2519 = vld [vmem:[#allocation7 + $0x200] sm:$0xf]
    %v2520 = vld [vmem:[#allocation7 + $0x204] sm:$0xf]
    %v2521 = vld [vmem:[#allocation7 + $0x208] sm:$0xf]
    %v2522 = vld [vmem:[#allocation7 + $0x20c] sm:$0xf]
    %v2523 = vld [vmem:[#allocation7 + $0x210] sm:$0xf]
    %v2524 = vld [vmem:[#allocation7 + $0x214] sm:$0xf]
    %v2525 = vld [vmem:[#allocation7 + $0x218] sm:$0xf]
    %v2526 = vld [vmem:[#allocation7 + $0x21c] sm:$0xf]
    %v2527 = vld [vmem:[#allocation7 + $0x220] sm:$0xf]
    %v2528 = vld [vmem:[#allocation7 + $0x224] sm:$0xf]
    %v2529 = vld [vmem:[#allocation7 + $0x228] sm:$0xf]
    %v2530 = vld [vmem:[#allocation7 + $0x22c] sm:$0xf]
    %v2531 = vld [vmem:[#allocation7 + $0x230] sm:$0xf]
    %v2532 = vld [vmem:[#allocation7 + $0x234] sm:$0xf]
    %v2533 = vld [vmem:[#allocation7 + $0x238] sm:$0xf]
    %v2534 = vld [vmem:[#allocation7 + $0x23c] sm:$0xf]
    %v2535 = vld [vmem:[%s4] sm:$0x1]
    %v2537 = vperm.slane %v2535, 0
    %v2683 = vunpack.c.l.b16 %v2391
    %v2684 = vunpack.c.l.b16 %v2392
    %v2685 = vunpack.c.l.b16 %v2393
    %v2686 = vunpack.c.l.b16 %v2394
    %v2687 = vunpack.c.l.b16 %v2395
    %v2688 = vunpack.c.l.b16 %v2396
    %v2689 = vunpack.c.l.b16 %v2397
    %v2690 = vunpack.c.l.b16 %v2398
    %v2691 = vunpack.c.l.b16 %v2399
    %v2692 = vunpack.c.l.b16 %v2400
    %v2693 = vunpack.c.l.b16 %v2401
    %v2694 = vunpack.c.l.b16 %v2402
    %v2695 = vunpack.c.l.b16 %v2403
    %v2696 = vunpack.c.l.b16 %v2404
    %v2697 = vunpack.c.l.b16 %v2405
    %v2698 = vunpack.c.l.b16 %v2406
    %v2699 = vunpack.c.l.b16 %v2407
    %v2700 = vunpack.c.l.b16 %v2408
    %v2701 = vunpack.c.l.b16 %v2409
    %v2702 = vunpack.c.l.b16 %v2410
    %v2703 = vunpack.c.l.b16 %v2411
    %v2704 = vunpack.c.l.b16 %v2412
    %v2705 = vunpack.c.l.b16 %v2413
    %v2706 = vunpack.c.l.b16 %v2414
    %v2707 = vunpack.c.l.b16 %v2415
    %v2708 = vunpack.c.l.b16 %v2416
    %v2709 = vunpack.c.l.b16 %v2417
    %v2710 = vunpack.c.l.b16 %v2418
    %v2711 = vunpack.c.l.b16 %v2419
    %v2712 = vunpack.c.l.b16 %v2420
    %v2713 = vunpack.c.l.b16 %v2421
    %v2714 = vunpack.c.l.b16 %v2422
    %v2715 = vunpack.c.l.b16 %v2423
    %v2716 = vunpack.c.l.b16 %v2424
    %v2717 = vunpack.c.l.b16 %v2425
    %v2718 = vunpack.c.l.b16 %v2426
    %v2719 = vunpack.c.l.b16 %v2427
    %v2720 = vunpack.c.l.b16 %v2428
    %v2721 = vunpack.c.l.b16 %v2429
    %v2722 = vunpack.c.l.b16 %v2430
    %v2723 = vunpack.c.l.b16 %v2431
    %v2724 = vunpack.c.l.b16 %v2432
    %v2725 = vunpack.c.l.b16 %v2433
    %v2726 = vunpack.c.l.b16 %v2434
    %v2727 = vunpack.c.l.b16 %v2435
    %v2728 = vunpack.c.l.b16 %v2436
    %v2729 = vunpack.c.l.b16 %v2437
    %v2730 = vunpack.c.l.b16 %v2438
    %v2731 = vunpack.c.l.b16 %v2439
    %v2732 = vunpack.c.l.b16 %v2440
    %v2733 = vunpack.c.l.b16 %v2441
    %v2734 = vunpack.c.l.b16 %v2442
    %v2735 = vunpack.c.l.b16 %v2443
    %v2736 = vunpack.c.l.b16 %v2444
    %v2737 = vunpack.c.l.b16 %v2445
    %v2738 = vunpack.c.l.b16 %v2446
    %v2739 = vunpack.c.l.b16 %v2447
    %v2740 = vunpack.c.l.b16 %v2448
    %v2741 = vunpack.c.l.b16 %v2449
    %v2742 = vunpack.c.l.b16 %v2450
    %v2743 = vunpack.c.l.b16 %v2451
    %v2744 = vunpack.c.l.b16 %v2452
    %v2745 = vunpack.c.l.b16 %v2453
    %v2746 = vunpack.c.l.b16 %v2454
    %v2747 = vunpack.c.l.b16 %v2455
    %v2748 = vunpack.c.l.b16 %v2456
    %v2749 = vunpack.c.l.b16 %v2457
    %v2750 = vunpack.c.l.b16 %v2458
    %v2751 = vunpack.c.l.b16 %v2459
    %v2752 = vunpack.c.l.b16 %v2460
    %v2753 = vunpack.c.l.b16 %v2461
    %v2754 = vunpack.c.l.b16 %v2462
    %v2755 = vunpack.c.l.b16 %v2463
    %v2756 = vunpack.c.l.b16 %v2464
    %v2757 = vunpack.c.l.b16 %v2465
    %v2758 = vunpack.c.l.b16 %v2466
    %v2759 = vunpack.c.l.b16 %v2467
    %v2760 = vunpack.c.l.b16 %v2468
    %v2761 = vunpack.c.l.b16 %v2469
    %v2762 = vunpack.c.l.b16 %v2470
    %v2763 = vunpack.c.l.b16 %v2471
    %v2764 = vunpack.c.l.b16 %v2472
    %v2765 = vunpack.c.l.b16 %v2473
    %v2766 = vunpack.c.l.b16 %v2474
    %v2767 = vunpack.c.l.b16 %v2475
    %v2768 = vunpack.c.l.b16 %v2476
    %v2769 = vunpack.c.l.b16 %v2477
    %v2770 = vunpack.c.l.b16 %v2478
    %v2771 = vunpack.c.l.b16 %v2479
    %v2772 = vunpack.c.l.b16 %v2480
    %v2773 = vunpack.c.l.b16 %v2481
    %v2774 = vunpack.c.l.b16 %v2482
    %v2775 = vunpack.c.l.b16 %v2483
    %v2776 = vunpack.c.l.b16 %v2484
    %v2777 = vunpack.c.l.b16 %v2485
    %v2778 = vunpack.c.l.b16 %v2486
    %v2779 = vunpack.c.l.b16 %v2487
    %v2780 = vunpack.c.l.b16 %v2488
    %v2781 = vunpack.c.l.b16 %v2489
    %v2782 = vunpack.c.l.b16 %v2490
    %v2783 = vunpack.c.l.b16 %v2491
    %v2784 = vunpack.c.l.b16 %v2492
    %v2785 = vunpack.c.l.b16 %v2493
    %v2786 = vunpack.c.l.b16 %v2494
    %v2787 = vunpack.c.l.b16 %v2495
    %v2788 = vunpack.c.l.b16 %v2496
    %v2789 = vunpack.c.l.b16 %v2497
    %v2790 = vunpack.c.l.b16 %v2498
    %v2791 = vunpack.c.l.b16 %v2499
    %v2792 = vunpack.c.l.b16 %v2500
    %v2793 = vunpack.c.l.b16 %v2501
    %v2794 = vunpack.c.l.b16 %v2502
    %v2795 = vunpack.c.l.b16 %v2503
    %v2796 = vunpack.c.l.b16 %v2504
    %v2797 = vunpack.c.l.b16 %v2505
    %v2798 = vunpack.c.l.b16 %v2506
    %v2799 = vunpack.c.l.b16 %v2507
    %v2800 = vunpack.c.l.b16 %v2508
    %v2801 = vunpack.c.l.b16 %v2509
    %v2802 = vunpack.c.l.b16 %v2510
    %v2803 = vunpack.c.l.b16 %v2511
    %v2804 = vunpack.c.l.b16 %v2512
    %v2805 = vunpack.c.l.b16 %v2513
    %v2806 = vunpack.c.l.b16 %v2514
    %v2807 = vunpack.c.l.b16 %v2515
    %v2808 = vunpack.c.l.b16 %v2516
    %v2809 = vunpack.c.l.b16 %v2517
    %v2810 = vunpack.c.l.b16 %v2518
    %v2811 = vunpack.c.l.b16 %v2519
    %v2812 = vunpack.c.l.b16 %v2520
    %v2813 = vunpack.c.l.b16 %v2521
    %v2814 = vunpack.c.l.b16 %v2522
    %v2815 = vunpack.c.l.b16 %v2523
    %v2816 = vunpack.c.l.b16 %v2524
    %v2817 = vunpack.c.l.b16 %v2525
    %v2818 = vunpack.c.l.b16 %v2526
    %v2819 = vunpack.c.l.b16 %v2527
    %v2820 = vunpack.c.l.b16 %v2528
    %v2821 = vunpack.c.l.b16 %v2529
    %v2822 = vunpack.c.l.b16 %v2530
    %v2823 = vunpack.c.l.b16 %v2531
    %v2824 = vunpack.c.l.b16 %v2532
    %v2825 = vunpack.c.l.b16 %v2533
    %v2826 = vunpack.c.l.b16 %v2534
    %v2827 = vpack.c.b16 %v2684, %v2683
    %v2828 = vpack.c.b16 %v2686, %v2685
    %v2829 = vpack.c.b16 %v2688, %v2687
    %v2830 = vpack.c.b16 %v2690, %v2689
    %v2831 = vpack.c.b16 %v2692, %v2691
    %v2832 = vpack.c.b16 %v2694, %v2693
    %v2833 = vpack.c.b16 %v2696, %v2695
    %v2834 = vpack.c.b16 %v2698, %v2697
    %v2835 = vpack.c.b16 %v2700, %v2699
    %v2836 = vpack.c.b16 %v2702, %v2701
    %v2837 = vpack.c.b16 %v2704, %v2703
    %v2838 = vpack.c.b16 %v2706, %v2705
    %v2839 = vpack.c.b16 %v2708, %v2707
    %v2840 = vpack.c.b16 %v2710, %v2709
    %v2841 = vpack.c.b16 %v2712, %v2711
    %v2842 = vpack.c.b16 %v2714, %v2713
    %v2843 = vpack.c.b16 %v2716, %v2715
    %v2844 = vpack.c.b16 %v2718, %v2717
    %v2845 = vpack.c.b16 %v2720, %v2719
    %v2846 = vpack.c.b16 %v2722, %v2721
    %v2847 = vpack.c.b16 %v2724, %v2723
    %v2848 = vpack.c.b16 %v2726, %v2725
    %v2849 = vpack.c.b16 %v2728, %v2727
    %v2850 = vpack.c.b16 %v2730, %v2729
    %v2851 = vpack.c.b16 %v2732, %v2731
    %v2852 = vpack.c.b16 %v2734, %v2733
    %v2853 = vpack.c.b16 %v2736, %v2735
    %v2854 = vpack.c.b16 %v2738, %v2737
    %v2855 = vpack.c.b16 %v2740, %v2739
    %v2856 = vpack.c.b16 %v2742, %v2741
    %v2857 = vpack.c.b16 %v2744, %v2743
    %v2858 = vpack.c.b16 %v2746, %v2745
    %v2859 = vpack.c.b16 %v2748, %v2747
    %v2860 = vpack.c.b16 %v2750, %v2749
    %v2861 = vpack.c.b16 %v2752, %v2751
    %v2862 = vpack.c.b16 %v2754, %v2753
    %v2863 = vpack.c.b16 %v2756, %v2755
    %v2864 = vpack.c.b16 %v2758, %v2757
    %v2865 = vpack.c.b16 %v2760, %v2759
    %v2866 = vpack.c.b16 %v2762, %v2761
    %v2867 = vpack.c.b16 %v2764, %v2763
    %v2868 = vpack.c.b16 %v2766, %v2765
    %v2869 = vpack.c.b16 %v2768, %v2767
    %v2870 = vpack.c.b16 %v2770, %v2769
    %v2871 = vpack.c.b16 %v2772, %v2771
    %v2872 = vpack.c.b16 %v2774, %v2773
    %v2873 = vpack.c.b16 %v2776, %v2775
    %v2874 = vpack.c.b16 %v2778, %v2777
    %v2875 = vpack.c.b16 %v2780, %v2779
    %v2876 = vpack.c.b16 %v2782, %v2781
    %v2877 = vpack.c.b16 %v2784, %v2783
    %v2878 = vpack.c.b16 %v2786, %v2785
    %v2879 = vpack.c.b16 %v2788, %v2787
    %v2880 = vpack.c.b16 %v2790, %v2789
    %v2881 = vpack.c.b16 %v2792, %v2791
    %v2882 = vpack.c.b16 %v2794, %v2793
    %v2883 = vpack.c.b16 %v2796, %v2795
    %v2884 = vpack.c.b16 %v2798, %v2797
    %v2885 = vpack.c.b16 %v2800, %v2799
    %v2886 = vpack.c.b16 %v2802, %v2801
    %v2887 = vpack.c.b16 %v2804, %v2803
    %v2888 = vpack.c.b16 %v2806, %v2805
    %v2889 = vpack.c.b16 %v2808, %v2807
    %v2890 = vpack.c.b16 %v2810, %v2809
    %v2891 = vpack.c.b16 %v2812, %v2811
    %v2892 = vpack.c.b16 %v2814, %v2813
    %v2893 = vpack.c.b16 %v2816, %v2815
    %v2894 = vpack.c.b16 %v2818, %v2817
    %v2895 = vpack.c.b16 %v2820, %v2819
    %v2896 = vpack.c.b16 %v2822, %v2821
    %v2897 = vpack.c.b16 %v2824, %v2823
    %v2898 = vpack.c.b16 %v2826, %v2825
    %2971 = vmatpush.bf16.msra.mxu0 %v2834
    %2972 = vmatpush.bf16.msra.mxu0 %v2833
    %2973 = vmatpush.bf16.msra.mxu0 %v2832
    %2974 = vmatpush.bf16.msra.mxu0 %v2831
    %2975 = vmatpush.bf16.msra.mxu0 %v2830
    %2976 = vmatpush.bf16.msra.mxu0 %v2829
    %2977 = vmatpush.bf16.msra.mxu0 %v2828
    %2978 = vmatpush.bf16.msra.mxu0 %v2827
    %2979 = vmatmul.bf16.gmra.mxu0 %v2283
    %v2980 = vpop.f32.mrf.mxu0
    %v2981 = vadd.f32 %v2537, %v2980
    %v2982 = vpop.f32.mrf.mxu0
    %v2983 = vadd.f32 %v2537, %v2982
    %2984 = vmatmul.bf16.gmra.mxu0 %v2289
    %v2985 = vpop.f32.mrf.mxu0
    %v2986 = vadd.f32 %v2537, %v2985
    %v2987 = vpop.f32.mrf.mxu0
    %v2988 = vadd.f32 %v2537, %v2987
    %2989 = vmatmul.bf16.gmra.mxu0 %v2295
    %v2990 = vpop.f32.mrf.mxu0
    %v2991 = vadd.f32 %v2537, %v2990
    %v2992 = vpop.f32.mrf.mxu0
    %v2993 = vadd.f32 %v2537, %v2992
    %2994 = vmatmul.bf16.gmra.mxu0 %v2301
    %v2995 = vpop.f32.mrf.mxu0
    %v2996 = vadd.f32 %v2537, %v2995
    %v2997 = vpop.f32.mrf.mxu0
    %v2998 = vadd.f32 %v2537, %v2997
    %2999 = vmatmul.bf16.gmra.mxu0 %v2337
    %v3000 = vpop.f32.mrf.mxu0
    %v3001 = vadd.f32 %v2537, %v3000
    %v3002 = vpop.f32.mrf.mxu0
    %v3003 = vadd.f32 %v2537, %v3002
    %3004 = vmatmul.bf16.gmra.mxu0 %v2343
    %v3005 = vpop.f32.mrf.mxu0
    %v3006 = vadd.f32 %v2537, %v3005
    %v3007 = vpop.f32.mrf.mxu0
    %v3008 = vadd.f32 %v2537, %v3007
    %3009 = vmatmul.bf16.gmra.mxu0 %v2349
    %v3010 = vpop.f32.mrf.mxu0
    %v3011 = vadd.f32 %v2537, %v3010
    %v3012 = vpop.f32.mrf.mxu0
    %v3013 = vadd.f32 %v2537, %v3012
    %3014 = vmatmul.bf16.gmra.mxu0 %v2355
    %v3015 = vpop.f32.mrf.mxu0
    %v3016 = vadd.f32 %v2537, %v3015
    %v3017 = vpop.f32.mrf.mxu0
    %v3018 = vadd.f32 %v2537, %v3017
    %3019 = vdwg.mxu0
    %3020 = vmatpush.bf16.msra.mxu0 %v2842
    %3021 = vmatpush.bf16.msra.mxu0 %v2841
    %3022 = vmatpush.bf16.msra.mxu0 %v2840
    %3023 = vmatpush.bf16.msra.mxu0 %v2839
    %3024 = vmatpush.bf16.msra.mxu0 %v2838
    %3025 = vmatpush.bf16.msra.mxu0 %v2837
    %3026 = vmatpush.bf16.msra.mxu0 %v2836
    %3027 = vmatpush.bf16.msra.mxu0 %v2835
    %3028 = vmatmul.bf16.gmra.mxu0 %v2284
    %v3029 = vpop.f32.mrf.mxu0
    %v3030 = vadd.f32 %v2981, %v3029
    %v3031 = vpop.f32.mrf.mxu0
    %v3032 = vadd.f32 %v2983, %v3031
    %3033 = vmatmul.bf16.gmra.mxu0 %v2290
    %v3034 = vpop.f32.mrf.mxu0
    %v3035 = vadd.f32 %v2986, %v3034
    %v3036 = vpop.f32.mrf.mxu0
    %v3037 = vadd.f32 %v2988, %v3036
    %3038 = vmatmul.bf16.gmra.mxu0 %v2296
    %v3039 = vpop.f32.mrf.mxu0
    %v3040 = vadd.f32 %v2991, %v3039
    %v3041 = vpop.f32.mrf.mxu0
    %v3042 = vadd.f32 %v2993, %v3041
    %3043 = vmatmul.bf16.gmra.mxu0 %v2302
    %v3044 = vpop.f32.mrf.mxu0
    %v3045 = vadd.f32 %v2996, %v3044
    %v3046 = vpop.f32.mrf.mxu0
    %v3047 = vadd.f32 %v2998, %v3046
    %3048 = vmatmul.bf16.gmra.mxu0 %v2338
    %v3049 = vpop.f32.mrf.mxu0
    %v3050 = vadd.f32 %v3001, %v3049
    %v3051 = vpop.f32.mrf.mxu0
    %v3052 = vadd.f32 %v3003, %v3051
    %3053 = vmatmul.bf16.gmra.mxu0 %v2344
    %v3054 = vpop.f32.mrf.mxu0
    %v3055 = vadd.f32 %v3006, %v3054
    %v3056 = vpop.f32.mrf.mxu0
    %v3057 = vadd.f32 %v3008, %v3056
    %3058 = vmatmul.bf16.gmra.mxu0 %v2350
    %v3059 = vpop.f32.mrf.mxu0
    %v3060 = vadd.f32 %v3011, %v3059
    %v3061 = vpop.f32.mrf.mxu0
    %v3062 = vadd.f32 %v3013, %v3061
    %3063 = vmatmul.bf16.gmra.mxu0 %v2356
    %v3064 = vpop.f32.mrf.mxu0
    %v3065 = vadd.f32 %v3016, %v3064
    %v3066 = vpop.f32.mrf.mxu0
    %v3067 = vadd.f32 %v3018, %v3066
    %3068 = vdwg.mxu0
    %3069 = vmatpush.bf16.msra.mxu0 %v2850
    %3070 = vmatpush.bf16.msra.mxu0 %v2849
    %3071 = vmatpush.bf16.msra.mxu0 %v2848
    %3072 = vmatpush.bf16.msra.mxu0 %v2847
    %3073 = vmatpush.bf16.msra.mxu0 %v2846
    %3074 = vmatpush.bf16.msra.mxu0 %v2845
    %3075 = vmatpush.bf16.msra.mxu0 %v2844
    %3076 = vmatpush.bf16.msra.mxu0 %v2843
    %3077 = vmatmul.bf16.gmra.mxu0 %v2285
    %v3078 = vpop.f32.mrf.mxu0
    %v3079 = vadd.f32 %v3030, %v3078
    %v3080 = vpop.f32.mrf.mxu0
    %v3081 = vadd.f32 %v3032, %v3080
    %3082 = vmatmul.bf16.gmra.mxu0 %v2291
    %v3083 = vpop.f32.mrf.mxu0
    %v3084 = vadd.f32 %v3035, %v3083
    %v3085 = vpop.f32.mrf.mxu0
    %v3086 = vadd.f32 %v3037, %v3085
    %3087 = vmatmul.bf16.gmra.mxu0 %v2297
    %v3088 = vpop.f32.mrf.mxu0
    %v3089 = vadd.f32 %v3040, %v3088
    %v3090 = vpop.f32.mrf.mxu0
    %v3091 = vadd.f32 %v3042, %v3090
    %3092 = vmatmul.bf16.gmra.mxu0 %v2303
    %v3093 = vpop.f32.mrf.mxu0
    %v3094 = vadd.f32 %v3045, %v3093
    %v3095 = vpop.f32.mrf.mxu0
    %v3096 = vadd.f32 %v3047, %v3095
    %3097 = vmatmul.bf16.gmra.mxu0 %v2339
    %v3098 = vpop.f32.mrf.mxu0
    %v3099 = vadd.f32 %v3050, %v3098
    %v3100 = vpop.f32.mrf.mxu0
    %v3101 = vadd.f32 %v3052, %v3100
    %3102 = vmatmul.bf16.gmra.mxu0 %v2345
    %v3103 = vpop.f32.mrf.mxu0
    %v3104 = vadd.f32 %v3055, %v3103
    %v3105 = vpop.f32.mrf.mxu0
    %v3106 = vadd.f32 %v3057, %v3105
    %3107 = vmatmul.bf16.gmra.mxu0 %v2351
    %v3108 = vpop.f32.mrf.mxu0
    %v3109 = vadd.f32 %v3060, %v3108
    %v3110 = vpop.f32.mrf.mxu0
    %v3111 = vadd.f32 %v3062, %v3110
    %3112 = vmatmul.bf16.gmra.mxu0 %v2357
    %v3113 = vpop.f32.mrf.mxu0
    %v3114 = vadd.f32 %v3065, %v3113
    %v3115 = vpop.f32.mrf.mxu0
    %v3116 = vadd.f32 %v3067, %v3115
    %3117 = vdwg.mxu0
    %3118 = vmatpush.bf16.msra.mxu0 %v2858
    %3119 = vmatpush.bf16.msra.mxu0 %v2857
    %3120 = vmatpush.bf16.msra.mxu0 %v2856
    %3121 = vmatpush.bf16.msra.mxu0 %v2855
    %3122 = vmatpush.bf16.msra.mxu0 %v2854
    %3123 = vmatpush.bf16.msra.mxu0 %v2853
    %3124 = vmatpush.bf16.msra.mxu0 %v2852
    %3125 = vmatpush.bf16.msra.mxu0 %v2851
    %3126 = vmatmul.bf16.gmra.mxu0 %v2286
    %v3127 = vpop.f32.mrf.mxu0
    %v3128 = vadd.f32 %v3079, %v3127
    %v3129 = vpop.f32.mrf.mxu0
    %v3130 = vadd.f32 %v3081, %v3129
    %3131 = vmatmul.bf16.gmra.mxu0 %v2292
    %v3132 = vpop.f32.mrf.mxu0
    %v3133 = vadd.f32 %v3084, %v3132
    %v3134 = vpop.f32.mrf.mxu0
    %v3135 = vadd.f32 %v3086, %v3134
    %3136 = vmatmul.bf16.gmra.mxu0 %v2298
    %v3137 = vpop.f32.mrf.mxu0
    %v3138 = vadd.f32 %v3089, %v3137
    %v3139 = vpop.f32.mrf.mxu0
    %v3140 = vadd.f32 %v3091, %v3139
    %3141 = vmatmul.bf16.gmra.mxu0 %v2304
    %v3142 = vpop.f32.mrf.mxu0
    %v3143 = vadd.f32 %v3094, %v3142
    %v3144 = vpop.f32.mrf.mxu0
    %v3145 = vadd.f32 %v3096, %v3144
    %3146 = vmatmul.bf16.gmra.mxu0 %v2340
    %v3147 = vpop.f32.mrf.mxu0
    %v3148 = vadd.f32 %v3099, %v3147
    %v3149 = vpop.f32.mrf.mxu0
    %v3150 = vadd.f32 %v3101, %v3149
    %3151 = vmatmul.bf16.gmra.mxu0 %v2346
    %v3152 = vpop.f32.mrf.mxu0
    %v3153 = vadd.f32 %v3104, %v3152
    %v3154 = vpop.f32.mrf.mxu0
    %v3155 = vadd.f32 %v3106, %v3154
    %3156 = vmatmul.bf16.gmra.mxu0 %v2352
    %v3157 = vpop.f32.mrf.mxu0
    %v3158 = vadd.f32 %v3109, %v3157
    %v3159 = vpop.f32.mrf.mxu0
    %v3160 = vadd.f32 %v3111, %v3159
    %3161 = vmatmul.bf16.gmra.mxu0 %v2358
    %v3162 = vpop.f32.mrf.mxu0
    %v3163 = vadd.f32 %v3114, %v3162
    %v3164 = vpop.f32.mrf.mxu0
    %v3165 = vadd.f32 %v3116, %v3164
    %3166 = vdwg.mxu0
    %3167 = vmatpush.bf16.msra.mxu0 %v2866
    %3168 = vmatpush.bf16.msra.mxu0 %v2865
    %3169 = vmatpush.bf16.msra.mxu0 %v2864
    %3170 = vmatpush.bf16.msra.mxu0 %v2863
    %3171 = vmatpush.bf16.msra.mxu0 %v2862
    %3172 = vmatpush.bf16.msra.mxu0 %v2861
    %3173 = vmatpush.bf16.msra.mxu0 %v2860
    %3174 = vmatpush.bf16.msra.mxu0 %v2859
    %3175 = vmatmul.bf16.gmra.mxu0 %v2287
    %v3176 = vpop.f32.mrf.mxu0
    %v3177 = vadd.f32 %v3128, %v3176
    %v3178 = vpop.f32.mrf.mxu0
    %v3179 = vadd.f32 %v3130, %v3178
    %3180 = vmatmul.bf16.gmra.mxu0 %v2293
    %v3181 = vpop.f32.mrf.mxu0
    %v3182 = vadd.f32 %v3133, %v3181
    %v3183 = vpop.f32.mrf.mxu0
    %v3184 = vadd.f32 %v3135, %v3183
    %3185 = vmatmul.bf16.gmra.mxu0 %v2299
    %v3186 = vpop.f32.mrf.mxu0
    %v3187 = vadd.f32 %v3138, %v3186
    %v3188 = vpop.f32.mrf.mxu0
    %v3189 = vadd.f32 %v3140, %v3188
    %3190 = vmatmul.bf16.gmra.mxu0 %v2305
    %v3191 = vpop.f32.mrf.mxu0
    %v3192 = vadd.f32 %v3143, %v3191
    %v3193 = vpop.f32.mrf.mxu0
    %v3194 = vadd.f32 %v3145, %v3193
    %3195 = vmatmul.bf16.gmra.mxu0 %v2341
    %v3196 = vpop.f32.mrf.mxu0
    %v3197 = vadd.f32 %v3148, %v3196
    %v3198 = vpop.f32.mrf.mxu0
    %v3199 = vadd.f32 %v3150, %v3198
    %3200 = vmatmul.bf16.gmra.mxu0 %v2347
    %v3201 = vpop.f32.mrf.mxu0
    %v3202 = vadd.f32 %v3153, %v3201
    %v3203 = vpop.f32.mrf.mxu0
    %v3204 = vadd.f32 %v3155, %v3203
    %3205 = vmatmul.bf16.gmra.mxu0 %v2353
    %v3206 = vpop.f32.mrf.mxu0
    %v3207 = vadd.f32 %v3158, %v3206
    %v3208 = vpop.f32.mrf.mxu0
    %v3209 = vadd.f32 %v3160, %v3208
    %3210 = vmatmul.bf16.gmra.mxu0 %v2359
    %v3211 = vpop.f32.mrf.mxu0
    %v3212 = vadd.f32 %v3163, %v3211
    %v3213 = vpop.f32.mrf.mxu0
    %v3214 = vadd.f32 %v3165, %v3213
    %3215 = vdwg.mxu0
    %3216 = vmatpush.bf16.msra.mxu0 %v2874
    %3217 = vmatpush.bf16.msra.mxu0 %v2873
    %3218 = vmatpush.bf16.msra.mxu0 %v2872
    %3219 = vmatpush.bf16.msra.mxu0 %v2871
    %3220 = vmatpush.bf16.msra.mxu0 %v2870
    %3221 = vmatpush.bf16.msra.mxu0 %v2869
    %3222 = vmatpush.bf16.msra.mxu0 %v2868
    %3223 = vmatpush.bf16.msra.mxu0 %v2867
    %3224 = vmatmul.bf16.gmra.mxu0 %v2288
    %v3225 = vpop.f32.mrf.mxu0
    %v3226 = vadd.f32 %v3177, %v3225
    %v3227 = vpop.f32.mrf.mxu0
    %v3228 = vadd.f32 %v3179, %v3227
    %3229 = vmatmul.bf16.gmra.mxu0 %v2294
    %v3230 = vpop.f32.mrf.mxu0
    %v3231 = vadd.f32 %v3182, %v3230
    %v3232 = vpop.f32.mrf.mxu0
    %v3233 = vadd.f32 %v3184, %v3232
    %3234 = vmatmul.bf16.gmra.mxu0 %v2300
    %v3235 = vpop.f32.mrf.mxu0
    %v3236 = vadd.f32 %v3187, %v3235
    %v3237 = vpop.f32.mrf.mxu0
    %v3238 = vadd.f32 %v3189, %v3237
    %3239 = vmatmul.bf16.gmra.mxu0 %v2306
    %v3240 = vpop.f32.mrf.mxu0
    %v3241 = vadd.f32 %v3192, %v3240
    %v3242 = vpop.f32.mrf.mxu0
    %v3243 = vadd.f32 %v3194, %v3242
    %3244 = vmatmul.bf16.gmra.mxu0 %v2342
    %v3245 = vpop.f32.mrf.mxu0
    %v3246 = vadd.f32 %v3197, %v3245
    %v3247 = vpop.f32.mrf.mxu0
    %v3248 = vadd.f32 %v3199, %v3247
    %3249 = vmatmul.bf16.gmra.mxu0 %v2348
    %v3250 = vpop.f32.mrf.mxu0
    %v3251 = vadd.f32 %v3202, %v3250
    %v3252 = vpop.f32.mrf.mxu0
    %v3253 = vadd.f32 %v3204, %v3252
    %3254 = vmatmul.bf16.gmra.mxu0 %v2354
    %v3255 = vpop.f32.mrf.mxu0
    %v3256 = vadd.f32 %v3207, %v3255
    %v3257 = vpop.f32.mrf.mxu0
    %v3258 = vadd.f32 %v3209, %v3257
    %3259 = vmatmul.bf16.gmra.mxu0 %v2360
    %v3260 = vpop.f32.mrf.mxu0
    %v3261 = vadd.f32 %v3212, %v3260
    %v3262 = vpop.f32.mrf.mxu0
    %v3263 = vadd.f32 %v3214, %v3262
    %3264 = vdwg.mxu0
    %3265 = vmatpush.bf16.msra.mxu0 %v2882
    %3266 = vmatpush.bf16.msra.mxu0 %v2881
    %3267 = vmatpush.bf16.msra.mxu0 %v2880
    %3268 = vmatpush.bf16.msra.mxu0 %v2879
    %3269 = vmatpush.bf16.msra.mxu0 %v2878
    %3270 = vmatpush.bf16.msra.mxu0 %v2877
    %3271 = vmatpush.bf16.msra.mxu0 %v2876
    %3272 = vmatpush.bf16.msra.mxu0 %v2875
    %3273 = vmatmul.bf16.gmra.mxu0 %v2289
    %v3274 = vpop.f32.mrf.mxu0
    %v3275 = vadd.f32 %v3226, %v3274
    %v3276 = vpop.f32.mrf.mxu0
    %v3277 = vadd.f32 %v3228, %v3276
    %3278 = vmatmul.bf16.gmra.mxu0 %v2295
    %v3279 = vpop.f32.mrf.mxu0
    %v3280 = vadd.f32 %v3231, %v3279
    %v3281 = vpop.f32.mrf.mxu0
    %v3282 = vadd.f32 %v3233, %v3281
    %3283 = vmatmul.bf16.gmra.mxu0 %v2301
    %v3284 = vpop.f32.mrf.mxu0
    %v3285 = vadd.f32 %v3236, %v3284
    %v3286 = vpop.f32.mrf.mxu0
    %v3287 = vadd.f32 %v3238, %v3286
    %3288 = vmatmul.bf16.gmra.mxu0 %v2307
    %v3289 = vpop.f32.mrf.mxu0
    %v3290 = vadd.f32 %v3241, %v3289
    %v3291 = vpop.f32.mrf.mxu0
    %v3292 = vadd.f32 %v3243, %v3291
    %3293 = vmatmul.bf16.gmra.mxu0 %v2343
    %v3294 = vpop.f32.mrf.mxu0
    %v3295 = vadd.f32 %v3246, %v3294
    %v3296 = vpop.f32.mrf.mxu0
    %v3297 = vadd.f32 %v3248, %v3296
    %3298 = vmatmul.bf16.gmra.mxu0 %v2349
    %v3299 = vpop.f32.mrf.mxu0
    %v3300 = vadd.f32 %v3251, %v3299
    %v3301 = vpop.f32.mrf.mxu0
    %v3302 = vadd.f32 %v3253, %v3301
    %3303 = vmatmul.bf16.gmra.mxu0 %v2355
    %v3304 = vpop.f32.mrf.mxu0
    %v3305 = vadd.f32 %v3256, %v3304
    %v3306 = vpop.f32.mrf.mxu0
    %v3307 = vadd.f32 %v3258, %v3306
    %3308 = vmatmul.bf16.gmra.mxu0 %v2361
    %v3309 = vpop.f32.mrf.mxu0
    %v3310 = vadd.f32 %v3261, %v3309
    %v3311 = vpop.f32.mrf.mxu0
    %v3312 = vadd.f32 %v3263, %v3311
    %3313 = vdwg.mxu0
    %3314 = vmatpush.bf16.msra.mxu0 %v2890
    %3315 = vmatpush.bf16.msra.mxu0 %v2889
    %3316 = vmatpush.bf16.msra.mxu0 %v2888
    %3317 = vmatpush.bf16.msra.mxu0 %v2887
    %3318 = vmatpush.bf16.msra.mxu0 %v2886
    %3319 = vmatpush.bf16.msra.mxu0 %v2885
    %3320 = vmatpush.bf16.msra.mxu0 %v2884
    %3321 = vmatpush.bf16.msra.mxu0 %v2883
    %3322 = vmatmul.bf16.gmra.mxu0 %v2290
    %v3323 = vpop.f32.mrf.mxu0
    %v3324 = vadd.f32 %v3275, %v3323
    %v3325 = vpop.f32.mrf.mxu0
    %v3326 = vadd.f32 %v3277, %v3325
    %3327 = vmatmul.bf16.gmra.mxu0 %v2296
    %v3328 = vpop.f32.mrf.mxu0
    %v3329 = vadd.f32 %v3280, %v3328
    %v3330 = vpop.f32.mrf.mxu0
    %v3331 = vadd.f32 %v3282, %v3330
    %3332 = vmatmul.bf16.gmra.mxu0 %v2302
    %v3333 = vpop.f32.mrf.mxu0
    %v3334 = vadd.f32 %v3285, %v3333
    %v3335 = vpop.f32.mrf.mxu0
    %v3336 = vadd.f32 %v3287, %v3335
    %3337 = vmatmul.bf16.gmra.mxu0 %v2308
    %v3338 = vpop.f32.mrf.mxu0
    %v3339 = vadd.f32 %v3290, %v3338
    %v3340 = vpop.f32.mrf.mxu0
    %v3341 = vadd.f32 %v3292, %v3340
    %3342 = vmatmul.bf16.gmra.mxu0 %v2344
    %v3343 = vpop.f32.mrf.mxu0
    %v3344 = vadd.f32 %v3295, %v3343
    %v3345 = vpop.f32.mrf.mxu0
    %v3346 = vadd.f32 %v3297, %v3345
    %3347 = vmatmul.bf16.gmra.mxu0 %v2350
    %v3348 = vpop.f32.mrf.mxu0
    %v3349 = vadd.f32 %v3300, %v3348
    %v3350 = vpop.f32.mrf.mxu0
    %v3351 = vadd.f32 %v3302, %v3350
    %3352 = vmatmul.bf16.gmra.mxu0 %v2356
    %v3353 = vpop.f32.mrf.mxu0
    %v3354 = vadd.f32 %v3305, %v3353
    %v3355 = vpop.f32.mrf.mxu0
    %v3356 = vadd.f32 %v3307, %v3355
    %3357 = vmatmul.bf16.gmra.mxu0 %v2362
    %v3358 = vpop.f32.mrf.mxu0
    %v3359 = vadd.f32 %v3310, %v3358
    %v3360 = vpop.f32.mrf.mxu0
    %v3361 = vadd.f32 %v3312, %v3360
    %3362 = vdwg.mxu0
    %3363 = vmatpush.bf16.msra.mxu0 %v2898
    %3364 = vmatpush.bf16.msra.mxu0 %v2897
    %3365 = vmatpush.bf16.msra.mxu0 %v2896
    %3366 = vmatpush.bf16.msra.mxu0 %v2895
    %3367 = vmatpush.bf16.msra.mxu0 %v2894
    %3368 = vmatpush.bf16.msra.mxu0 %v2893
    %3369 = vmatpush.bf16.msra.mxu0 %v2892
    %3370 = vmatpush.bf16.msra.mxu0 %v2891
    %3371 = vmatmul.bf16.gmra.mxu0 %v2291
    %v3372 = vpop.f32.mrf.mxu0
    %v3373 = vadd.f32 %v3324, %v3372
    %v3374 = vpop.f32.mrf.mxu0
    %v3375 = vadd.f32 %v3326, %v3374
    %3376 = vmatmul.bf16.gmra.mxu0 %v2297
    %v3377 = vpop.f32.mrf.mxu0
    %v3378 = vadd.f32 %v3329, %v3377
    %v3379 = vpop.f32.mrf.mxu0
    %v3380 = vadd.f32 %v3331, %v3379
    %3381 = vmatmul.bf16.gmra.mxu0 %v2303
    %v3382 = vpop.f32.mrf.mxu0
    %v3383 = vadd.f32 %v3334, %v3382
    %v3384 = vpop.f32.mrf.mxu0
    %v3385 = vadd.f32 %v3336, %v3384
    %3386 = vmatmul.bf16.gmra.mxu0 %v2309
    %v3387 = vpop.f32.mrf.mxu0
    %v3388 = vadd.f32 %v3339, %v3387
    %v3389 = vpop.f32.mrf.mxu0
    %v3390 = vadd.f32 %v3341, %v3389
    %3391 = vmatmul.bf16.gmra.mxu0 %v2345
    %v3392 = vpop.f32.mrf.mxu0
    %v3393 = vadd.f32 %v3344, %v3392
    %v3394 = vpop.f32.mrf.mxu0
    %v3395 = vadd.f32 %v3346, %v3394
    %3396 = vmatmul.bf16.gmra.mxu0 %v2351
    %v3397 = vpop.f32.mrf.mxu0
    %v3398 = vadd.f32 %v3349, %v3397
    %v3399 = vpop.f32.mrf.mxu0
    %v3400 = vadd.f32 %v3351, %v3399
    %3401 = vmatmul.bf16.gmra.mxu0 %v2357
    %v3402 = vpop.f32.mrf.mxu0
    %v3403 = vadd.f32 %v3354, %v3402
    %v3404 = vpop.f32.mrf.mxu0
    %v3405 = vadd.f32 %v3356, %v3404
    %3406 = vmatmul.bf16.gmra.mxu0 %v2363
    %v3407 = vpop.f32.mrf.mxu0
    %v3408 = vadd.f32 %v3359, %v3407
    %v3409 = vpop.f32.mrf.mxu0
    %v3410 = vadd.f32 %v3361, %v3409
    %3411 = vdwg.mxu0
    %v3412 = vmax.f32 %v3373, 0.0
    %v3413 = vmax.f32 %v3375, 0.0
    %v3414 = vmax.f32 %v3378, 0.0
    %v3415 = vmax.f32 %v3380, 0.0
    %v3416 = vmax.f32 %v3383, 0.0
    %v3417 = vmax.f32 %v3385, 0.0
    %v3418 = vmax.f32 %v3388, 0.0
    %v3419 = vmax.f32 %v3390, 0.0
    %v3420 = vmax.f32 %v3393, 0.0
    %v3421 = vmax.f32 %v3395, 0.0
    %v3422 = vmax.f32 %v3398, 0.0
    %v3423 = vmax.f32 %v3400, 0.0
    %v3424 = vmax.f32 %v3403, 0.0
    %v3425 = vmax.f32 %v3405, 0.0
    %v3426 = vmax.f32 %v3408, 0.0
    %v3427 = vmax.f32 %v3410, 0.0
    %3428 = vst [vmem:[#allocation8] sm:$0xff] %v3412
    %3429 = vst [vmem:[#allocation8 + $0x8] sm:$0xff] %v3413
    %3430 = vst [vmem:[#allocation8 + $0x10] sm:$0xff] %v3414
    %3431 = vst [vmem:[#allocation8 + $0x18] sm:$0xff] %v3415
    %3432 = vst [vmem:[#allocation8 + $0x20] sm:$0xff] %v3416
    %3433 = vst [vmem:[#allocation8 + $0x28] sm:$0xff] %v3417
    %3434 = vst [vmem:[#allocation8 + $0x30] sm:$0xff] %v3418
    %3435 = vst [vmem:[#allocation8 + $0x38] sm:$0xff] %v3419
    %3436 = vst [vmem:[#allocation8 + $0x40] sm:$0xff] %v3420
    %3437 = vst [vmem:[#allocation8 + $0x48] sm:$0xff] %v3421
    %3438 = vst [vmem:[#allocation8 + $0x50] sm:$0xff] %v3422
    %3439 = vst [vmem:[#allocation8 + $0x58] sm:$0xff] %v3423
    %3440 = vst [vmem:[#allocation8 + $0x60] sm:$0xff] %v3424
    %3441 = vst [vmem:[#allocation8 + $0x68] sm:$0xff] %v3425
    %3442 = vst [vmem:[#allocation8 + $0x70] sm:$0xff] %v3426
    %3443 = vst [vmem:[#allocation8 + $0x78] sm:$0xff] %v3427
    // Predicated region
    $region34: #{tpu_custom_call.1} parent=1 // pred_check
      _
    $region35: #{tpu_custom_call.1} parent=1 // pred_check_branch
      %3445 = sbr.rel (0) target = $region37
    $region36: #{tpu_custom_call.1} parent=1 // pred_region
      %3447 = vsyncadd [#allocation4], 0
      %s3448 = sshll.u32 [#allocation8], 4
      %s3449 = int_to_ptr.vmem [resolvable:$true] %s3448
      %s3450 = sshll.u32 %s5, 4
      %s3451 = int_to_ptr.hbm [resolvable:$true] %s3450
      %3456 = dma.vmem_to_hbm [thread:$0]  %s3449, 2048, %s3451, [#allocation4], 128, 128, 8
    $region37: #{tpu_custom_call.1} parent=1 // pred_fallthru
      _
    // Predicated region
    $region38: #{tpu_custom_call.1} parent=1 // pred_check
      _
    $region39: #{tpu_custom_call.1} parent=1 // pred_check_branch
      %3458 = sbr.rel (0) target = $region41
    $region40: #{tpu_custom_call.1} parent=1 // pred_region
      %3460 = dma.done [#allocation4], 2048
    $region41: #{tpu_custom_call.1} parent=1 // pred_fallthru
      _
    %3461 = vsyncpa [#allocation3], 1
    %3462 = vsyncpa [#allocation6], 1
    %3463 = vsyncpa [#allocation4], 1

</llo_original>
